<compile_context>
chip_gen: v7x
topology: tpu7x:2x2x1
jax: 0.10.0
libtpu: 0.0.40
codegen_flags: <defaults>
</compile_context>

<pallas_src>
import functools

import jax
import jax.numpy as jnp
from jax.experimental import pallas as pl
from jax.experimental.pallas import tpu as pltpu


def _lstm_kernel(x_ref, wih_ref, whh_ref, b_ref, mask_ref, out_ref, last_ref):
    """Whole-sequence LSTM in one invocation.

    Refs (all VMEM, full blocks):
      x_ref    : (B, L, D) f32   inputs, batch-major (native layout, no transpose)
      wih_ref  : (D, 4H)  f32    W_ih^T   (gate order i, f, g, o)
      whh_ref  : (H, 4H)  f32    W_hh^T
      b_ref    : (1, 4H)  f32    b_ih + b_hh
      mask_ref : (L, B, H) f32   1.0 where t < lengths[b] else 0.0 (pre-broadcast)
      out_ref  : (B, L, H) f32   per-timestep outputs (zeros past lengths)
      last_ref : (B, H)   f32    h at t = lengths[b] - 1
    """
    B, L, D = x_ref.shape
    H = whh_ref.shape[0]

    # --- Hoisted input projection: one MXU matmul for all timesteps. ---------
    x_flat = x_ref[...].reshape(B * L, D)                       # layout-compatible merge
    gx = jnp.dot(x_flat, wih_ref[...],
                 preferred_element_type=jnp.float32) + b_ref[...]   # (B*L, 4H)
    gx = gx.reshape(B, L, 4 * H)                                # (B, L, 4H)

    whh = whh_ref[...]                                          # (H, 4H), loaded once

    h = jnp.zeros((B, H), jnp.float32)
    c = jnp.zeros((B, H), jnp.float32)

    # Static, fully-unrolled recurrence (L is a small compile-time constant).
    for t in range(L):
        gates = gx[:, t, :] + jnp.dot(h, whh,
                                      preferred_element_type=jnp.float32)  # (B, 4H)
        i_g = jax.nn.sigmoid(gates[:, 0 * H:1 * H])
        f_g = jax.nn.sigmoid(gates[:, 1 * H:2 * H])
        g_g = jnp.tanh(gates[:, 2 * H:3 * H])
        o_g = jax.nn.sigmoid(gates[:, 3 * H:4 * H])

        c_new = f_g * c + i_g * g_g
        h_new = o_g * jnp.tanh(c_new)

        m = mask_ref[t]                                         # (B, H), 0/1 f32
        # packed-sequence semantics: freeze state past each sequence's length
        c = c + m * (c_new - c)
        h = h + m * (h_new - h)
        # pad_packed_sequence: zeros past each sequence's length
        out_ref[:, t, :] = (m * h_new).astype(out_ref.dtype)    # static-offset VMEM store

    # Because h is frozen once t >= lengths[b], the final h is exactly
    # h at t = lengths[b] - 1 (requires lengths >= 1, as PyTorch does).
    last_ref[...] = h.astype(last_ref.dtype)


@jax.jit
def lstm_encoder_forward(x, lengths, w_ih, w_hh, b_ih, b_hh):
    """x: (B, L, D) f32, lengths: (B,) int32. Returns (outputs (B,L,H), last (B,H))."""
    B, L, D = x.shape
    H = w_hh.shape[1]

    wih_t = jnp.transpose(w_ih).astype(jnp.float32)                 # (D, 4H)
    whh_t = jnp.transpose(w_hh).astype(jnp.float32)                 # (H, 4H)
    bias = (b_ih + b_hh).reshape(1, 4 * H).astype(jnp.float32)      # (1, 4H)

    # Validity mask built once, pre-broadcast to (L, B, H): replaces per-step
    # integer compares and the lengths tensor inside the kernel entirely.
    valid = (jnp.arange(L, dtype=jnp.int32)[:, None]
             < lengths.astype(jnp.int32)[None, :]).astype(jnp.float32)   # (L, B)
    mask = jnp.broadcast_to(valid[:, :, None], (L, B, H))                 # (L, B, H)

    outputs, last = pl.pallas_call(
        _lstm_kernel,
        out_shape=(
            jax.ShapeDtypeStruct((B, L, H), jnp.float32),
            jax.ShapeDtypeStruct((B, H), jnp.float32),
        ),
        grid=(1,),
        in_specs=[
            pl.BlockSpec((B, L, D), lambda i: (0, 0, 0)),       # x (native layout)
            pl.BlockSpec((D, 4 * H), lambda i: (0, 0)),         # W_ih^T
            pl.BlockSpec((H, 4 * H), lambda i: (0, 0)),         # W_hh^T
            pl.BlockSpec((1, 4 * H), lambda i: (0, 0)),         # bias
            pl.BlockSpec((L, B, H), lambda i: (0, 0, 0)),       # validity mask
        ],
        out_specs=(
            pl.BlockSpec((B, L, H), lambda i: (0, 0, 0)),       # outputs (batch-major)
            pl.BlockSpec((B, H), lambda i: (0, 0)),             # last outputs
        ),
        compiler_params=pltpu.CompilerParams(
            dimension_semantics=("arbitrary",)),
    )(x.astype(jnp.float32), wih_t, whh_t, bias, mask)

    # num_layers < 2 -> dropout(last_outputs); dropout=0.0 -> identity.
    return outputs, last


def _reference_forward(x, lengths, w_ih, w_hh, b_ih, b_hh):
    """Pure-JAX reference with identical packed-LSTM semantics."""
    B, L, D = x.shape
    H = w_hh.shape[1]
    h = jnp.zeros((B, H), jnp.float32)
    c = jnp.zeros((B, H), jnp.float32)
    outs = []
    for t in range(L):
        gates = x[:, t] @ w_ih.T + h @ w_hh.T + b_ih + b_hh
        i_g, f_g, g_g, o_g = jnp.split(gates, 4, axis=-1)
        i_g = jax.nn.sigmoid(i_g)
        f_g = jax.nn.sigmoid(f_g)
        g_g = jnp.tanh(g_g)
        o_g = jax.nn.sigmoid(o_g)
        c_new = f_g * c + i_g * g_g
        h_new = o_g * jnp.tanh(c_new)
        valid = (t < lengths)[:, None]
        h = jnp.where(valid, h_new, h)
        c = jnp.where(valid, c_new, c)
        outs.append(jnp.where(valid, h_new, 0.0))
    outputs = jnp.stack(outs, axis=1)
    last = outputs[jnp.arange(B), lengths - 1]
    return outputs, last


if __name__ == "__main__":
    # Module hyperparameters: input_size=16, rnn_size=32, num_layers=1,
    # dropout=0.0, bidirectional=False, batch_first=True.
    B, L, D, H = 2, 8, 16, 32

    key = jax.random.PRNGKey(0)
    kx, k1, k2, k3, k4 = jax.random.split(key, 5)

    x = jax.random.normal(kx, (B, L, D), dtype=jnp.float32)
    lengths = jnp.array([8, 5], dtype=jnp.int32)               # sorted descending, max == L, all >= 1

    # PyTorch nn.LSTM init: U(-1/sqrt(H), 1/sqrt(H)); gate order [i, f, g, o].
    bound = 1.0 / (H ** 0.5)
    w_ih = jax.random.uniform(k1, (4 * H, D), jnp.float32, -bound, bound)
    w_hh = jax.random.uniform(k2, (4 * H, H), jnp.float32, -bound, bound)
    b_ih = jax.random.uniform(k3, (4 * H,), jnp.float32, -bound, bound)
    b_hh = jax.random.uniform(k4, (4 * H,), jnp.float32, -bound, bound)

    outputs, last = lstm_encoder_forward(x, lengths, w_ih, w_hh, b_ih, b_hh)
    jax.block_until_ready((outputs, last))

    ref_out, ref_last = _reference_forward(x, lengths, w_ih, w_hh, b_ih, b_hh)
    assert outputs.shape == (B, L, H) and last.shape == (B, H)
    assert jnp.allclose(outputs, ref_out, rtol=1e-4, atol=1e-4)
    assert jnp.allclose(last, ref_last, rtol=1e-4, atol=1e-4)

    print("KERNEL_OK")
</pallas_src>

<mosaic_0001>
module attributes {stable_mosaic.version = 11 : i64} {
  func.func @_lstm_kernel(%arg0: i32, %arg1: memref<2x8x16xf32, #tpu.memory_space<vmem>>, %arg2: memref<16x128xf32, #tpu.memory_space<vmem>>, %arg3: memref<32x128xf32, #tpu.memory_space<vmem>>, %arg4: memref<1x128xf32, #tpu.memory_space<vmem>>, %arg5: memref<8x2x32xf32, #tpu.memory_space<vmem>>, %arg6: memref<2x8x32xf32, #tpu.memory_space<vmem>>, %arg7: memref<2x32xf32, #tpu.memory_space<vmem>>) attributes {dimension_semantics = [#tpu.dimension_semantics<arbitrary>], iteration_bounds = array<i64: 1>, scalar_prefetch = 0 : i64, scratch_operands = 0 : i64, tpu.core_type = #tpu.core_type<tc>, window_params = [{pipeline_mode = #tpu.pipeline_mode<synchronous>, transform_indices = @transform_0, window_bounds = array<i64: 2, 8, 16>}, {pipeline_mode = #tpu.pipeline_mode<synchronous>, transform_indices = @transform_1, window_bounds = array<i64: 16, 128>}, {pipeline_mode = #tpu.pipeline_mode<synchronous>, transform_indices = @transform_2, window_bounds = array<i64: 32, 128>}, {pipeline_mode = #tpu.pipeline_mode<synchronous>, transform_indices = @transform_3, window_bounds = array<i64: 1, 128>}, {pipeline_mode = #tpu.pipeline_mode<synchronous>, transform_indices = @transform_4, window_bounds = array<i64: 8, 2, 32>}, {pipeline_mode = #tpu.pipeline_mode<synchronous>, transform_indices = @transform_5, window_bounds = array<i64: 2, 8, 32>}, {pipeline_mode = #tpu.pipeline_mode<synchronous>, transform_indices = @transform_6, window_bounds = array<i64: 2, 32>}]} {
    %c0 = arith.constant 0 : index
    %c0_0 = arith.constant 0 : index
    %c0_1 = arith.constant 0 : index
    %0 = vector.load %arg1[%c0, %c0_0, %c0_1] : memref<2x8x16xf32, #tpu.memory_space<vmem>>, vector<2x8x16xf32>
    %1 = vector.shape_cast %0 : vector<2x8x16xf32> to vector<16x16xf32>
    %c0_2 = arith.constant 0 : index
    %c0_3 = arith.constant 0 : index
    %2 = vector.load %arg2[%c0_2, %c0_3] : memref<16x128xf32, #tpu.memory_space<vmem>>, vector<16x128xf32>
    %cst = arith.constant dense<0.000000e+00> : vector<16x128xf32>
    %3 = tpu.matmul %1, %2, %cst {dimension_numbers = #tpu.dot_dimension_numbers<[1], [0], [0], [1], [0, 0, 1, 1], [], []>} : vector<16x16xf32>, vector<16x128xf32>, vector<16x128xf32> -> vector<16x128xf32>
    %c0_4 = arith.constant 0 : index
    %c0_5 = arith.constant 0 : index
    %4 = vector.load %arg4[%c0_4, %c0_5] : memref<1x128xf32, #tpu.memory_space<vmem>>, vector<1x128xf32>
    %5 = vector.broadcast %4 : vector<1x128xf32> to vector<16x128xf32>
    %6 = arith.addf %3, %5 : vector<16x128xf32>
    %7 = vector.shape_cast %6 : vector<16x128xf32> to vector<2x8x128xf32>
    %c0_6 = arith.constant 0 : index
    %c0_7 = arith.constant 0 : index
    %8 = vector.load %arg3[%c0_6, %c0_7] : memref<32x128xf32, #tpu.memory_space<vmem>>, vector<32x128xf32>
    %cst_8 = arith.constant 0.000000e+00 : f32
    %9 = vector.broadcast %cst_8 : f32 to vector<2x32xf32>
    %cst_9 = arith.constant 0.000000e+00 : f32
    %10 = vector.broadcast %cst_9 : f32 to vector<2x32xf32>
    %11 = vector.extract_strided_slice %7 {offsets = [0, 0, 0], sizes = [2, 1, 128], strides = [1, 1, 1]} : vector<2x8x128xf32> to vector<2x1x128xf32>
    %12 = vector.shape_cast %11 : vector<2x1x128xf32> to vector<2x128xf32>
    %cst_10 = arith.constant dense<0.000000e+00> : vector<2x128xf32>
    %13 = tpu.matmul %9, %8, %cst_10 {dimension_numbers = #tpu.dot_dimension_numbers<[1], [0], [0], [1], [0, 0, 1, 1], [], []>} : vector<2x32xf32>, vector<32x128xf32>, vector<2x128xf32> -> vector<2x128xf32>
    %14 = arith.addf %12, %13 : vector<2x128xf32>
    %15 = vector.extract_strided_slice %14 {offsets = [0, 0], sizes = [2, 32], strides = [1, 1]} : vector<2x128xf32> to vector<2x32xf32>
    %16 = arith.negf %15 : vector<2x32xf32>
    %17 = math.exp %16 : vector<2x32xf32>
    %cst_11 = arith.constant 1.000000e+00 : f32
    %18 = vector.broadcast %cst_11 : f32 to vector<2x32xf32>
    %19 = arith.addf %18, %17 : vector<2x32xf32>
    %20 = arith.divf %18, %19 : vector<2x32xf32>
    %21 = vector.extract_strided_slice %14 {offsets = [0, 32], sizes = [2, 32], strides = [1, 1]} : vector<2x128xf32> to vector<2x32xf32>
    %22 = arith.negf %21 : vector<2x32xf32>
    %23 = math.exp %22 : vector<2x32xf32>
    %cst_12 = arith.constant 1.000000e+00 : f32
    %24 = vector.broadcast %cst_12 : f32 to vector<2x32xf32>
    %25 = arith.addf %24, %23 : vector<2x32xf32>
    %26 = arith.divf %24, %25 : vector<2x32xf32>
    %27 = vector.extract_strided_slice %14 {offsets = [0, 64], sizes = [2, 32], strides = [1, 1]} : vector<2x128xf32> to vector<2x32xf32>
    %28 = math.tanh %27 : vector<2x32xf32>
    %29 = vector.extract_strided_slice %14 {offsets = [0, 96], sizes = [2, 32], strides = [1, 1]} : vector<2x128xf32> to vector<2x32xf32>
    %30 = arith.negf %29 : vector<2x32xf32>
    %31 = math.exp %30 : vector<2x32xf32>
    %cst_13 = arith.constant 1.000000e+00 : f32
    %32 = vector.broadcast %cst_13 : f32 to vector<2x32xf32>
    %33 = arith.addf %32, %31 : vector<2x32xf32>
    %34 = arith.divf %32, %33 : vector<2x32xf32>
    %35 = arith.mulf %26, %10 : vector<2x32xf32>
    %36 = arith.mulf %20, %28 : vector<2x32xf32>
    %37 = arith.addf %35, %36 : vector<2x32xf32>
    %38 = math.tanh %37 : vector<2x32xf32>
    %39 = arith.mulf %34, %38 : vector<2x32xf32>
    %c0_14 = arith.constant 0 : index
    %c0_15 = arith.constant 0 : index
    %c0_16 = arith.constant 0 : index
    %40 = vector.load %arg5[%c0_14, %c0_15, %c0_16] : memref<8x2x32xf32, #tpu.memory_space<vmem>>, vector<1x2x32xf32>
    %41 = vector.shape_cast %40 : vector<1x2x32xf32> to vector<2x32xf32>
    %42 = arith.subf %37, %10 : vector<2x32xf32>
    %43 = arith.mulf %41, %42 : vector<2x32xf32>
    %44 = arith.addf %10, %43 : vector<2x32xf32>
    %45 = arith.subf %39, %9 : vector<2x32xf32>
    %46 = arith.mulf %41, %45 : vector<2x32xf32>
    %47 = arith.addf %9, %46 : vector<2x32xf32>
    %48 = arith.mulf %41, %39 : vector<2x32xf32>
    %c0_17 = arith.constant 0 : index
    %c0_18 = arith.constant 0 : index
    %c0_19 = arith.constant 0 : index
    %49 = vector.load %arg6[%c0_17, %c0_18, %c0_19] : memref<2x8x32xf32, #tpu.memory_space<vmem>>, vector<2x1x32xf32>
    %50 = vector.shape_cast %49 : vector<2x1x32xf32> to vector<2x32xf32>
    %51 = vector.shape_cast %48 : vector<2x32xf32> to vector<2x1x32xf32>
    tpu.vector_store %arg6[%c0_17, %c0_18, %c0_19], %51 {strides = array<i32>} : memref<2x8x32xf32, #tpu.memory_space<vmem>>, vector<2x1x32xf32>,
    %52 = vector.extract_strided_slice %7 {offsets = [0, 1, 0], sizes = [2, 1, 128], strides = [1, 1, 1]} : vector<2x8x128xf32> to vector<2x1x128xf32>
    %53 = vector.shape_cast %52 : vector<2x1x128xf32> to vector<2x128xf32>
    %cst_20 = arith.constant dense<0.000000e+00> : vector<2x128xf32>
    %54 = tpu.matmul %47, %8, %cst_20 {dimension_numbers = #tpu.dot_dimension_numbers<[1], [0], [0], [1], [0, 0, 1, 1], [], []>} : vector<2x32xf32>, vector<32x128xf32>, vector<2x128xf32> -> vector<2x128xf32>
    %55 = arith.addf %53, %54 : vector<2x128xf32>
    %56 = vector.extract_strided_slice %55 {offsets = [0, 0], sizes = [2, 32], strides = [1, 1]} : vector<2x128xf32> to vector<2x32xf32>
    %57 = arith.negf %56 : vector<2x32xf32>
    %58 = math.exp %57 : vector<2x32xf32>
    %cst_21 = arith.constant 1.000000e+00 : f32
    %59 = vector.broadcast %cst_21 : f32 to vector<2x32xf32>
    %60 = arith.addf %59, %58 : vector<2x32xf32>
    %61 = arith.divf %59, %60 : vector<2x32xf32>
    %62 = vector.extract_strided_slice %55 {offsets = [0, 32], sizes = [2, 32], strides = [1, 1]} : vector<2x128xf32> to vector<2x32xf32>
    %63 = arith.negf %62 : vector<2x32xf32>
    %64 = math.exp %63 : vector<2x32xf32>
    %cst_22 = arith.constant 1.000000e+00 : f32
    %65 = vector.broadcast %cst_22 : f32 to vector<2x32xf32>
    %66 = arith.addf %65, %64 : vector<2x32xf32>
    %67 = arith.divf %65, %66 : vector<2x32xf32>
    %68 = vector.extract_strided_slice %55 {offsets = [0, 64], sizes = [2, 32], strides = [1, 1]} : vector<2x128xf32> to vector<2x32xf32>
    %69 = math.tanh %68 : vector<2x32xf32>
    %70 = vector.extract_strided_slice %55 {offsets = [0, 96], sizes = [2, 32], strides = [1, 1]} : vector<2x128xf32> to vector<2x32xf32>
    %71 = arith.negf %70 : vector<2x32xf32>
    %72 = math.exp %71 : vector<2x32xf32>
    %cst_23 = arith.constant 1.000000e+00 : f32
    %73 = vector.broadcast %cst_23 : f32 to vector<2x32xf32>
    %74 = arith.addf %73, %72 : vector<2x32xf32>
    %75 = arith.divf %73, %74 : vector<2x32xf32>
    %76 = arith.mulf %67, %44 : vector<2x32xf32>
    %77 = arith.mulf %61, %69 : vector<2x32xf32>
    %78 = arith.addf %76, %77 : vector<2x32xf32>
    %79 = math.tanh %78 : vector<2x32xf32>
    %80 = arith.mulf %75, %79 : vector<2x32xf32>
    %c1 = arith.constant 1 : index
    %c0_24 = arith.constant 0 : index
    %c0_25 = arith.constant 0 : index
    %81 = vector.load %arg5[%c1, %c0_24, %c0_25] : memref<8x2x32xf32, #tpu.memory_space<vmem>>, vector<1x2x32xf32>
    %82 = vector.shape_cast %81 : vector<1x2x32xf32> to vector<2x32xf32>
    %83 = arith.subf %78, %44 : vector<2x32xf32>
    %84 = arith.mulf %82, %83 : vector<2x32xf32>
    %85 = arith.addf %44, %84 : vector<2x32xf32>
    %86 = arith.subf %80, %47 : vector<2x32xf32>
    %87 = arith.mulf %82, %86 : vector<2x32xf32>
    %88 = arith.addf %47, %87 : vector<2x32xf32>
    %89 = arith.mulf %82, %80 : vector<2x32xf32>
    %c0_26 = arith.constant 0 : index
    %c1_27 = arith.constant 1 : index
    %c0_28 = arith.constant 0 : index
    %90 = vector.load %arg6[%c0_26, %c1_27, %c0_28] : memref<2x8x32xf32, #tpu.memory_space<vmem>>, vector<2x1x32xf32>
    %91 = vector.shape_cast %90 : vector<2x1x32xf32> to vector<2x32xf32>
    %92 = vector.shape_cast %89 : vector<2x32xf32> to vector<2x1x32xf32>
    tpu.vector_store %arg6[%c0_26, %c1_27, %c0_28], %92 {strides = array<i32>} : memref<2x8x32xf32, #tpu.memory_space<vmem>>, vector<2x1x32xf32>,
    %93 = vector.extract_strided_slice %7 {offsets = [0, 2, 0], sizes = [2, 1, 128], strides = [1, 1, 1]} : vector<2x8x128xf32> to vector<2x1x128xf32>
    %94 = vector.shape_cast %93 : vector<2x1x128xf32> to vector<2x128xf32>
    %cst_29 = arith.constant dense<0.000000e+00> : vector<2x128xf32>
    %95 = tpu.matmul %88, %8, %cst_29 {dimension_numbers = #tpu.dot_dimension_numbers<[1], [0], [0], [1], [0, 0, 1, 1], [], []>} : vector<2x32xf32>, vector<32x128xf32>, vector<2x128xf32> -> vector<2x128xf32>
    %96 = arith.addf %94, %95 : vector<2x128xf32>
    %97 = vector.extract_strided_slice %96 {offsets = [0, 0], sizes = [2, 32], strides = [1, 1]} : vector<2x128xf32> to vector<2x32xf32>
    %98 = arith.negf %97 : vector<2x32xf32>
    %99 = math.exp %98 : vector<2x32xf32>
    %cst_30 = arith.constant 1.000000e+00 : f32
    %100 = vector.broadcast %cst_30 : f32 to vector<2x32xf32>
    %101 = arith.addf %100, %99 : vector<2x32xf32>
    %102 = arith.divf %100, %101 : vector<2x32xf32>
    %103 = vector.extract_strided_slice %96 {offsets = [0, 32], sizes = [2, 32], strides = [1, 1]} : vector<2x128xf32> to vector<2x32xf32>
    %104 = arith.negf %103 : vector<2x32xf32>
    %105 = math.exp %104 : vector<2x32xf32>
    %cst_31 = arith.constant 1.000000e+00 : f32
    %106 = vector.broadcast %cst_31 : f32 to vector<2x32xf32>
    %107 = arith.addf %106, %105 : vector<2x32xf32>
    %108 = arith.divf %106, %107 : vector<2x32xf32>
    %109 = vector.extract_strided_slice %96 {offsets = [0, 64], sizes = [2, 32], strides = [1, 1]} : vector<2x128xf32> to vector<2x32xf32>
    %110 = math.tanh %109 : vector<2x32xf32>
    %111 = vector.extract_strided_slice %96 {offsets = [0, 96], sizes = [2, 32], strides = [1, 1]} : vector<2x128xf32> to vector<2x32xf32>
    %112 = arith.negf %111 : vector<2x32xf32>
    %113 = math.exp %112 : vector<2x32xf32>
    %cst_32 = arith.constant 1.000000e+00 : f32
    %114 = vector.broadcast %cst_32 : f32 to vector<2x32xf32>
    %115 = arith.addf %114, %113 : vector<2x32xf32>
    %116 = arith.divf %114, %115 : vector<2x32xf32>
    %117 = arith.mulf %108, %85 : vector<2x32xf32>
    %118 = arith.mulf %102, %110 : vector<2x32xf32>
    %119 = arith.addf %117, %118 : vector<2x32xf32>
    %120 = math.tanh %119 : vector<2x32xf32>
    %121 = arith.mulf %116, %120 : vector<2x32xf32>
    %c2 = arith.constant 2 : index
    %c0_33 = arith.constant 0 : index
    %c0_34 = arith.constant 0 : index
    %122 = vector.load %arg5[%c2, %c0_33, %c0_34] : memref<8x2x32xf32, #tpu.memory_space<vmem>>, vector<1x2x32xf32>
    %123 = vector.shape_cast %122 : vector<1x2x32xf32> to vector<2x32xf32>
    %124 = arith.subf %119, %85 : vector<2x32xf32>
    %125 = arith.mulf %123, %124 : vector<2x32xf32>
    %126 = arith.addf %85, %125 : vector<2x32xf32>
    %127 = arith.subf %121, %88 : vector<2x32xf32>
    %128 = arith.mulf %123, %127 : vector<2x32xf32>
    %129 = arith.addf %88, %128 : vector<2x32xf32>
    %130 = arith.mulf %123, %121 : vector<2x32xf32>
    %c0_35 = arith.constant 0 : index
    %c2_36 = arith.constant 2 : index
    %c0_37 = arith.constant 0 : index
    %131 = vector.load %arg6[%c0_35, %c2_36, %c0_37] : memref<2x8x32xf32, #tpu.memory_space<vmem>>, vector<2x1x32xf32>
    %132 = vector.shape_cast %131 : vector<2x1x32xf32> to vector<2x32xf32>
    %133 = vector.shape_cast %130 : vector<2x32xf32> to vector<2x1x32xf32>
    tpu.vector_store %arg6[%c0_35, %c2_36, %c0_37], %133 {strides = array<i32>} : memref<2x8x32xf32, #tpu.memory_space<vmem>>, vector<2x1x32xf32>,
    %134 = vector.extract_strided_slice %7 {offsets = [0, 3, 0], sizes = [2, 1, 128], strides = [1, 1, 1]} : vector<2x8x128xf32> to vector<2x1x128xf32>
    %135 = vector.shape_cast %134 : vector<2x1x128xf32> to vector<2x128xf32>
    %cst_38 = arith.constant dense<0.000000e+00> : vector<2x128xf32>
    %136 = tpu.matmul %129, %8, %cst_38 {dimension_numbers = #tpu.dot_dimension_numbers<[1], [0], [0], [1], [0, 0, 1, 1], [], []>} : vector<2x32xf32>, vector<32x128xf32>, vector<2x128xf32> -> vector<2x128xf32>
    %137 = arith.addf %135, %136 : vector<2x128xf32>
    %138 = vector.extract_strided_slice %137 {offsets = [0, 0], sizes = [2, 32], strides = [1, 1]} : vector<2x128xf32> to vector<2x32xf32>
    %139 = arith.negf %138 : vector<2x32xf32>
    %140 = math.exp %139 : vector<2x32xf32>
    %cst_39 = arith.constant 1.000000e+00 : f32
    %141 = vector.broadcast %cst_39 : f32 to vector<2x32xf32>
    %142 = arith.addf %141, %140 : vector<2x32xf32>
    %143 = arith.divf %141, %142 : vector<2x32xf32>
    %144 = vector.extract_strided_slice %137 {offsets = [0, 32], sizes = [2, 32], strides = [1, 1]} : vector<2x128xf32> to vector<2x32xf32>
    %145 = arith.negf %144 : vector<2x32xf32>
    %146 = math.exp %145 : vector<2x32xf32>
    %cst_40 = arith.constant 1.000000e+00 : f32
    %147 = vector.broadcast %cst_40 : f32 to vector<2x32xf32>
    %148 = arith.addf %147, %146 : vector<2x32xf32>
    %149 = arith.divf %147, %148 : vector<2x32xf32>
    %150 = vector.extract_strided_slice %137 {offsets = [0, 64], sizes = [2, 32], strides = [1, 1]} : vector<2x128xf32> to vector<2x32xf32>
    %151 = math.tanh %150 : vector<2x32xf32>
    %152 = vector.extract_strided_slice %137 {offsets = [0, 96], sizes = [2, 32], strides = [1, 1]} : vector<2x128xf32> to vector<2x32xf32>
    %153 = arith.negf %152 : vector<2x32xf32>
    %154 = math.exp %153 : vector<2x32xf32>
    %cst_41 = arith.constant 1.000000e+00 : f32
    %155 = vector.broadcast %cst_41 : f32 to vector<2x32xf32>
    %156 = arith.addf %155, %154 : vector<2x32xf32>
    %157 = arith.divf %155, %156 : vector<2x32xf32>
    %158 = arith.mulf %149, %126 : vector<2x32xf32>
    %159 = arith.mulf %143, %151 : vector<2x32xf32>
    %160 = arith.addf %158, %159 : vector<2x32xf32>
    %161 = math.tanh %160 : vector<2x32xf32>
    %162 = arith.mulf %157, %161 : vector<2x32xf32>
    %c3 = arith.constant 3 : index
    %c0_42 = arith.constant 0 : index
    %c0_43 = arith.constant 0 : index
    %163 = vector.load %arg5[%c3, %c0_42, %c0_43] : memref<8x2x32xf32, #tpu.memory_space<vmem>>, vector<1x2x32xf32>
    %164 = vector.shape_cast %163 : vector<1x2x32xf32> to vector<2x32xf32>
    %165 = arith.subf %160, %126 : vector<2x32xf32>
    %166 = arith.mulf %164, %165 : vector<2x32xf32>
    %167 = arith.addf %126, %166 : vector<2x32xf32>
    %168 = arith.subf %162, %129 : vector<2x32xf32>
    %169 = arith.mulf %164, %168 : vector<2x32xf32>
    %170 = arith.addf %129, %169 : vector<2x32xf32>
    %171 = arith.mulf %164, %162 : vector<2x32xf32>
    %c0_44 = arith.constant 0 : index
    %c3_45 = arith.constant 3 : index
    %c0_46 = arith.constant 0 : index
    %172 = vector.load %arg6[%c0_44, %c3_45, %c0_46] : memref<2x8x32xf32, #tpu.memory_space<vmem>>, vector<2x1x32xf32>
    %173 = vector.shape_cast %172 : vector<2x1x32xf32> to vector<2x32xf32>
    %174 = vector.shape_cast %171 : vector<2x32xf32> to vector<2x1x32xf32>
    tpu.vector_store %arg6[%c0_44, %c3_45, %c0_46], %174 {strides = array<i32>} : memref<2x8x32xf32, #tpu.memory_space<vmem>>, vector<2x1x32xf32>,
    %175 = vector.extract_strided_slice %7 {offsets = [0, 4, 0], sizes = [2, 1, 128], strides = [1, 1, 1]} : vector<2x8x128xf32> to vector<2x1x128xf32>
    %176 = vector.shape_cast %175 : vector<2x1x128xf32> to vector<2x128xf32>
    %cst_47 = arith.constant dense<0.000000e+00> : vector<2x128xf32>
    %177 = tpu.matmul %170, %8, %cst_47 {dimension_numbers = #tpu.dot_dimension_numbers<[1], [0], [0], [1], [0, 0, 1, 1], [], []>} : vector<2x32xf32>, vector<32x128xf32>, vector<2x128xf32> -> vector<2x128xf32>
    %178 = arith.addf %176, %177 : vector<2x128xf32>
    %179 = vector.extract_strided_slice %178 {offsets = [0, 0], sizes = [2, 32], strides = [1, 1]} : vector<2x128xf32> to vector<2x32xf32>
    %180 = arith.negf %179 : vector<2x32xf32>
    %181 = math.exp %180 : vector<2x32xf32>
    %cst_48 = arith.constant 1.000000e+00 : f32
    %182 = vector.broadcast %cst_48 : f32 to vector<2x32xf32>
    %183 = arith.addf %182, %181 : vector<2x32xf32>
    %184 = arith.divf %182, %183 : vector<2x32xf32>
    %185 = vector.extract_strided_slice %178 {offsets = [0, 32], sizes = [2, 32], strides = [1, 1]} : vector<2x128xf32> to vector<2x32xf32>
    %186 = arith.negf %185 : vector<2x32xf32>
    %187 = math.exp %186 : vector<2x32xf32>
    %cst_49 = arith.constant 1.000000e+00 : f32
    %188 = vector.broadcast %cst_49 : f32 to vector<2x32xf32>
    %189 = arith.addf %188, %187 : vector<2x32xf32>
    %190 = arith.divf %188, %189 : vector<2x32xf32>
    %191 = vector.extract_strided_slice %178 {offsets = [0, 64], sizes = [2, 32], strides = [1, 1]} : vector<2x128xf32> to vector<2x32xf32>
    %192 = math.tanh %191 : vector<2x32xf32>
    %193 = vector.extract_strided_slice %178 {offsets = [0, 96], sizes = [2, 32], strides = [1, 1]} : vector<2x128xf32> to vector<2x32xf32>
    %194 = arith.negf %193 : vector<2x32xf32>
    %195 = math.exp %194 : vector<2x32xf32>
    %cst_50 = arith.constant 1.000000e+00 : f32
    %196 = vector.broadcast %cst_50 : f32 to vector<2x32xf32>
    %197 = arith.addf %196, %195 : vector<2x32xf32>
    %198 = arith.divf %196, %197 : vector<2x32xf32>
    %199 = arith.mulf %190, %167 : vector<2x32xf32>
    %200 = arith.mulf %184, %192 : vector<2x32xf32>
    %201 = arith.addf %199, %200 : vector<2x32xf32>
    %202 = math.tanh %201 : vector<2x32xf32>
    %203 = arith.mulf %198, %202 : vector<2x32xf32>
    %c4 = arith.constant 4 : index
    %c0_51 = arith.constant 0 : index
    %c0_52 = arith.constant 0 : index
    %204 = vector.load %arg5[%c4, %c0_51, %c0_52] : memref<8x2x32xf32, #tpu.memory_space<vmem>>, vector<1x2x32xf32>
    %205 = vector.shape_cast %204 : vector<1x2x32xf32> to vector<2x32xf32>
    %206 = arith.subf %201, %167 : vector<2x32xf32>
    %207 = arith.mulf %205, %206 : vector<2x32xf32>
    %208 = arith.addf %167, %207 : vector<2x32xf32>
    %209 = arith.subf %203, %170 : vector<2x32xf32>
    %210 = arith.mulf %205, %209 : vector<2x32xf32>
    %211 = arith.addf %170, %210 : vector<2x32xf32>
    %212 = arith.mulf %205, %203 : vector<2x32xf32>
    %c0_53 = arith.constant 0 : index
    %c4_54 = arith.constant 4 : index
    %c0_55 = arith.constant 0 : index
    %213 = vector.load %arg6[%c0_53, %c4_54, %c0_55] : memref<2x8x32xf32, #tpu.memory_space<vmem>>, vector<2x1x32xf32>
    %214 = vector.shape_cast %213 : vector<2x1x32xf32> to vector<2x32xf32>
    %215 = vector.shape_cast %212 : vector<2x32xf32> to vector<2x1x32xf32>
    tpu.vector_store %arg6[%c0_53, %c4_54, %c0_55], %215 {strides = array<i32>} : memref<2x8x32xf32, #tpu.memory_space<vmem>>, vector<2x1x32xf32>,
    %216 = vector.extract_strided_slice %7 {offsets = [0, 5, 0], sizes = [2, 1, 128], strides = [1, 1, 1]} : vector<2x8x128xf32> to vector<2x1x128xf32>
    %217 = vector.shape_cast %216 : vector<2x1x128xf32> to vector<2x128xf32>
    %cst_56 = arith.constant dense<0.000000e+00> : vector<2x128xf32>
    %218 = tpu.matmul %211, %8, %cst_56 {dimension_numbers = #tpu.dot_dimension_numbers<[1], [0], [0], [1], [0, 0, 1, 1], [], []>} : vector<2x32xf32>, vector<32x128xf32>, vector<2x128xf32> -> vector<2x128xf32>
    %219 = arith.addf %217, %218 : vector<2x128xf32>
    %220 = vector.extract_strided_slice %219 {offsets = [0, 0], sizes = [2, 32], strides = [1, 1]} : vector<2x128xf32> to vector<2x32xf32>
    %221 = arith.negf %220 : vector<2x32xf32>
    %222 = math.exp %221 : vector<2x32xf32>
    %cst_57 = arith.constant 1.000000e+00 : f32
    %223 = vector.broadcast %cst_57 : f32 to vector<2x32xf32>
    %224 = arith.addf %223, %222 : vector<2x32xf32>
    %225 = arith.divf %223, %224 : vector<2x32xf32>
    %226 = vector.extract_strided_slice %219 {offsets = [0, 32], sizes = [2, 32], strides = [1, 1]} : vector<2x128xf32> to vector<2x32xf32>
    %227 = arith.negf %226 : vector<2x32xf32>
    %228 = math.exp %227 : vector<2x32xf32>
    %cst_58 = arith.constant 1.000000e+00 : f32
    %229 = vector.broadcast %cst_58 : f32 to vector<2x32xf32>
    %230 = arith.addf %229, %228 : vector<2x32xf32>
    %231 = arith.divf %229, %230 : vector<2x32xf32>
    %232 = vector.extract_strided_slice %219 {offsets = [0, 64], sizes = [2, 32], strides = [1, 1]} : vector<2x128xf32> to vector<2x32xf32>
    %233 = math.tanh %232 : vector<2x32xf32>
    %234 = vector.extract_strided_slice %219 {offsets = [0, 96], sizes = [2, 32], strides = [1, 1]} : vector<2x128xf32> to vector<2x32xf32>
    %235 = arith.negf %234 : vector<2x32xf32>
    %236 = math.exp %235 : vector<2x32xf32>
    %cst_59 = arith.constant 1.000000e+00 : f32
    %237 = vector.broadcast %cst_59 : f32 to vector<2x32xf32>
    %238 = arith.addf %237, %236 : vector<2x32xf32>
    %239 = arith.divf %237, %238 : vector<2x32xf32>
    %240 = arith.mulf %231, %208 : vector<2x32xf32>
    %241 = arith.mulf %225, %233 : vector<2x32xf32>
    %242 = arith.addf %240, %241 : vector<2x32xf32>
    %243 = math.tanh %242 : vector<2x32xf32>
    %244 = arith.mulf %239, %243 : vector<2x32xf32>
    %c5 = arith.constant 5 : index
    %c0_60 = arith.constant 0 : index
    %c0_61 = arith.constant 0 : index
    %245 = vector.load %arg5[%c5, %c0_60, %c0_61] : memref<8x2x32xf32, #tpu.memory_space<vmem>>, vector<1x2x32xf32>
    %246 = vector.shape_cast %245 : vector<1x2x32xf32> to vector<2x32xf32>
    %247 = arith.subf %242, %208 : vector<2x32xf32>
    %248 = arith.mulf %246, %247 : vector<2x32xf32>
    %249 = arith.addf %208, %248 : vector<2x32xf32>
    %250 = arith.subf %244, %211 : vector<2x32xf32>
    %251 = arith.mulf %246, %250 : vector<2x32xf32>
    %252 = arith.addf %211, %251 : vector<2x32xf32>
    %253 = arith.mulf %246, %244 : vector<2x32xf32>
    %c0_62 = arith.constant 0 : index
    %c5_63 = arith.constant 5 : index
    %c0_64 = arith.constant 0 : index
    %254 = vector.load %arg6[%c0_62, %c5_63, %c0_64] : memref<2x8x32xf32, #tpu.memory_space<vmem>>, vector<2x1x32xf32>
    %255 = vector.shape_cast %254 : vector<2x1x32xf32> to vector<2x32xf32>
    %256 = vector.shape_cast %253 : vector<2x32xf32> to vector<2x1x32xf32>
    tpu.vector_store %arg6[%c0_62, %c5_63, %c0_64], %256 {strides = array<i32>} : memref<2x8x32xf32, #tpu.memory_space<vmem>>, vector<2x1x32xf32>,
    %257 = vector.extract_strided_slice %7 {offsets = [0, 6, 0], sizes = [2, 1, 128], strides = [1, 1, 1]} : vector<2x8x128xf32> to vector<2x1x128xf32>
    %258 = vector.shape_cast %257 : vector<2x1x128xf32> to vector<2x128xf32>
    %cst_65 = arith.constant dense<0.000000e+00> : vector<2x128xf32>
    %259 = tpu.matmul %252, %8, %cst_65 {dimension_numbers = #tpu.dot_dimension_numbers<[1], [0], [0], [1], [0, 0, 1, 1], [], []>} : vector<2x32xf32>, vector<32x128xf32>, vector<2x128xf32> -> vector<2x128xf32>
    %260 = arith.addf %258, %259 : vector<2x128xf32>
    %261 = vector.extract_strided_slice %260 {offsets = [0, 0], sizes = [2, 32], strides = [1, 1]} : vector<2x128xf32> to vector<2x32xf32>
    %262 = arith.negf %261 : vector<2x32xf32>
    %263 = math.exp %262 : vector<2x32xf32>
    %cst_66 = arith.constant 1.000000e+00 : f32
    %264 = vector.broadcast %cst_66 : f32 to vector<2x32xf32>
    %265 = arith.addf %264, %263 : vector<2x32xf32>
    %266 = arith.divf %264, %265 : vector<2x32xf32>
    %267 = vector.extract_strided_slice %260 {offsets = [0, 32], sizes = [2, 32], strides = [1, 1]} : vector<2x128xf32> to vector<2x32xf32>
    %268 = arith.negf %267 : vector<2x32xf32>
    %269 = math.exp %268 : vector<2x32xf32>
    %cst_67 = arith.constant 1.000000e+00 : f32
    %270 = vector.broadcast %cst_67 : f32 to vector<2x32xf32>
    %271 = arith.addf %270, %269 : vector<2x32xf32>
    %272 = arith.divf %270, %271 : vector<2x32xf32>
    %273 = vector.extract_strided_slice %260 {offsets = [0, 64], sizes = [2, 32], strides = [1, 1]} : vector<2x128xf32> to vector<2x32xf32>
    %274 = math.tanh %273 : vector<2x32xf32>
    %275 = vector.extract_strided_slice %260 {offsets = [0, 96], sizes = [2, 32], strides = [1, 1]} : vector<2x128xf32> to vector<2x32xf32>
    %276 = arith.negf %275 : vector<2x32xf32>
    %277 = math.exp %276 : vector<2x32xf32>
    %cst_68 = arith.constant 1.000000e+00 : f32
    %278 = vector.broadcast %cst_68 : f32 to vector<2x32xf32>
    %279 = arith.addf %278, %277 : vector<2x32xf32>
    %280 = arith.divf %278, %279 : vector<2x32xf32>
    %281 = arith.mulf %272, %249 : vector<2x32xf32>
    %282 = arith.mulf %266, %274 : vector<2x32xf32>
    %283 = arith.addf %281, %282 : vector<2x32xf32>
    %284 = math.tanh %283 : vector<2x32xf32>
    %285 = arith.mulf %280, %284 : vector<2x32xf32>
    %c6 = arith.constant 6 : index
    %c0_69 = arith.constant 0 : index
    %c0_70 = arith.constant 0 : index
    %286 = vector.load %arg5[%c6, %c0_69, %c0_70] : memref<8x2x32xf32, #tpu.memory_space<vmem>>, vector<1x2x32xf32>
    %287 = vector.shape_cast %286 : vector<1x2x32xf32> to vector<2x32xf32>
    %288 = arith.subf %283, %249 : vector<2x32xf32>
    %289 = arith.mulf %287, %288 : vector<2x32xf32>
    %290 = arith.addf %249, %289 : vector<2x32xf32>
    %291 = arith.subf %285, %252 : vector<2x32xf32>
    %292 = arith.mulf %287, %291 : vector<2x32xf32>
    %293 = arith.addf %252, %292 : vector<2x32xf32>
    %294 = arith.mulf %287, %285 : vector<2x32xf32>
    %c0_71 = arith.constant 0 : index
    %c6_72 = arith.constant 6 : index
    %c0_73 = arith.constant 0 : index
    %295 = vector.load %arg6[%c0_71, %c6_72, %c0_73] : memref<2x8x32xf32, #tpu.memory_space<vmem>>, vector<2x1x32xf32>
    %296 = vector.shape_cast %295 : vector<2x1x32xf32> to vector<2x32xf32>
    %297 = vector.shape_cast %294 : vector<2x32xf32> to vector<2x1x32xf32>
    tpu.vector_store %arg6[%c0_71, %c6_72, %c0_73], %297 {strides = array<i32>} : memref<2x8x32xf32, #tpu.memory_space<vmem>>, vector<2x1x32xf32>,
    %298 = vector.extract_strided_slice %7 {offsets = [0, 7, 0], sizes = [2, 1, 128], strides = [1, 1, 1]} : vector<2x8x128xf32> to vector<2x1x128xf32>
    %299 = vector.shape_cast %298 : vector<2x1x128xf32> to vector<2x128xf32>
    %cst_74 = arith.constant dense<0.000000e+00> : vector<2x128xf32>
    %300 = tpu.matmul %293, %8, %cst_74 {dimension_numbers = #tpu.dot_dimension_numbers<[1], [0], [0], [1], [0, 0, 1, 1], [], []>} : vector<2x32xf32>, vector<32x128xf32>, vector<2x128xf32> -> vector<2x128xf32>
    %301 = arith.addf %299, %300 : vector<2x128xf32>
    %302 = vector.extract_strided_slice %301 {offsets = [0, 0], sizes = [2, 32], strides = [1, 1]} : vector<2x128xf32> to vector<2x32xf32>
    %303 = arith.negf %302 : vector<2x32xf32>
    %304 = math.exp %303 : vector<2x32xf32>
    %cst_75 = arith.constant 1.000000e+00 : f32
    %305 = vector.broadcast %cst_75 : f32 to vector<2x32xf32>
    %306 = arith.addf %305, %304 : vector<2x32xf32>
    %307 = arith.divf %305, %306 : vector<2x32xf32>
    %308 = vector.extract_strided_slice %301 {offsets = [0, 32], sizes = [2, 32], strides = [1, 1]} : vector<2x128xf32> to vector<2x32xf32>
    %309 = arith.negf %308 : vector<2x32xf32>
    %310 = math.exp %309 : vector<2x32xf32>
    %cst_76 = arith.constant 1.000000e+00 : f32
    %311 = vector.broadcast %cst_76 : f32 to vector<2x32xf32>
    %312 = arith.addf %311, %310 : vector<2x32xf32>
    %313 = arith.divf %311, %312 : vector<2x32xf32>
    %314 = vector.extract_strided_slice %301 {offsets = [0, 64], sizes = [2, 32], strides = [1, 1]} : vector<2x128xf32> to vector<2x32xf32>
    %315 = math.tanh %314 : vector<2x32xf32>
    %316 = vector.extract_strided_slice %301 {offsets = [0, 96], sizes = [2, 32], strides = [1, 1]} : vector<2x128xf32> to vector<2x32xf32>
    %317 = arith.negf %316 : vector<2x32xf32>
    %318 = math.exp %317 : vector<2x32xf32>
    %cst_77 = arith.constant 1.000000e+00 : f32
    %319 = vector.broadcast %cst_77 : f32 to vector<2x32xf32>
    %320 = arith.addf %319, %318 : vector<2x32xf32>
    %321 = arith.divf %319, %320 : vector<2x32xf32>
    %322 = arith.mulf %313, %290 : vector<2x32xf32>
    %323 = arith.mulf %307, %315 : vector<2x32xf32>
    %324 = arith.addf %322, %323 : vector<2x32xf32>
    %325 = math.tanh %324 : vector<2x32xf32>
    %326 = arith.mulf %321, %325 : vector<2x32xf32>
    %c7 = arith.constant 7 : index
    %c0_78 = arith.constant 0 : index
    %c0_79 = arith.constant 0 : index
    %327 = vector.load %arg5[%c7, %c0_78, %c0_79] : memref<8x2x32xf32, #tpu.memory_space<vmem>>, vector<1x2x32xf32>
    %328 = vector.shape_cast %327 : vector<1x2x32xf32> to vector<2x32xf32>
    %329 = arith.subf %326, %293 : vector<2x32xf32>
    %330 = arith.mulf %328, %329 : vector<2x32xf32>
    %331 = arith.addf %293, %330 : vector<2x32xf32>
    %332 = arith.mulf %328, %326 : vector<2x32xf32>
    %c0_80 = arith.constant 0 : index
    %c7_81 = arith.constant 7 : index
    %c0_82 = arith.constant 0 : index
    %333 = vector.load %arg6[%c0_80, %c7_81, %c0_82] : memref<2x8x32xf32, #tpu.memory_space<vmem>>, vector<2x1x32xf32>
    %334 = vector.shape_cast %333 : vector<2x1x32xf32> to vector<2x32xf32>
    %335 = vector.shape_cast %332 : vector<2x32xf32> to vector<2x1x32xf32>
    tpu.vector_store %arg6[%c0_80, %c7_81, %c0_82], %335 {strides = array<i32>} : memref<2x8x32xf32, #tpu.memory_space<vmem>>, vector<2x1x32xf32>,
    %c0_83 = arith.constant 0 : index
    %c0_84 = arith.constant 0 : index
    %336 = vector.load %arg7[%c0_83, %c0_84] : memref<2x32xf32, #tpu.memory_space<vmem>>, vector<2x32xf32>
    tpu.vector_store %arg7[%c0_83, %c0_84], %331 {strides = array<i32>} : memref<2x32xf32, #tpu.memory_space<vmem>>, vector<2x32xf32>,
    return
  }
  func.func @transform_0(%arg0: i32) -> (i32, i32, i32) {
    %c0_i32 = arith.constant 0 : i32
    %c0_i32_0 = arith.constant 0 : i32
    %c0_i32_1 = arith.constant 0 : i32
    %c0_i32_2 = arith.constant 0 : i32
    return %c0_i32, %c0_i32_0, %c0_i32_1 : i32, i32, i32
  }
  func.func @transform_1(%arg0: i32) -> (i32, i32) {
    %c0_i32 = arith.constant 0 : i32
    %c0_i32_0 = arith.constant 0 : i32
    %c0_i32_1 = arith.constant 0 : i32
    return %c0_i32, %c0_i32_0 : i32, i32
  }
  func.func @transform_2(%arg0: i32) -> (i32, i32) {
    %c0_i32 = arith.constant 0 : i32
    %c0_i32_0 = arith.constant 0 : i32
    %c0_i32_1 = arith.constant 0 : i32
    return %c0_i32, %c0_i32_0 : i32, i32
  }
  func.func @transform_3(%arg0: i32) -> (i32, i32) {
    %c0_i32 = arith.constant 0 : i32
    %c0_i32_0 = arith.constant 0 : i32
    %c0_i32_1 = arith.constant 0 : i32
    return %c0_i32, %c0_i32_0 : i32, i32
  }
  func.func @transform_4(%arg0: i32) -> (i32, i32, i32) {
    %c0_i32 = arith.constant 0 : i32
    %c0_i32_0 = arith.constant 0 : i32
    %c0_i32_1 = arith.constant 0 : i32
    %c0_i32_2 = arith.constant 0 : i32
    return %c0_i32, %c0_i32_0, %c0_i32_1 : i32, i32, i32
  }
  func.func @transform_5(%arg0: i32) -> (i32, i32, i32) {
    %c0_i32 = arith.constant 0 : i32
    %c0_i32_0 = arith.constant 0 : i32
    %c0_i32_1 = arith.constant 0 : i32
    %c0_i32_2 = arith.constant 0 : i32
    return %c0_i32, %c0_i32_0, %c0_i32_1 : i32, i32, i32
  }
  func.func @transform_6(%arg0: i32) -> (i32, i32) {
    %c0_i32 = arith.constant 0 : i32
    %c0_i32_0 = arith.constant 0 : i32
    %c0_i32_1 = arith.constant 0 : i32
    return %c0_i32, %c0_i32_0 : i32, i32
  }
}

</mosaic_0001>

<llo_original>
// kernel: lstm_encoder_forward.1
$region0: #{lstm_encoder_forward.1}
  #allocation0 [shape = 'u32[]', space=smem, size = 0x4, offset = 0x4, fixed_abs, tag = 'smem constant byte address 0x4 - core index']
  #allocation1 [shape = 'u32[144,128]{1,0:T(1,128)}', space=vmem, size = 0x12000, scoped, tag = 'internal scratch']
  %s0 = inlined_call_operand.vmem [shape: f32[2,8,16], index: 0, kind: input, shape index: {}]
  %s1 = inlined_call_operand.hbm [shape: f32[16,128], index: 1, kind: input, shape index: {}]
  %s2 = inlined_call_operand.vmem [shape: f32[32,128], index: 2, kind: input, shape index: {}]
  %s3 = inlined_call_operand.vmem [shape: f32[1,128], index: 3, kind: input, shape index: {}]
  %s4 = inlined_call_operand.vmem [shape: f32[8,2,32], index: 4, kind: input, shape index: {}]
  %s5 = inlined_call_operand.hbm [shape: f32[2,8,32], index: 5, kind: output, shape index: {0}]
  %s6 = inlined_call_operand.hbm [shape: f32[2,32], index: 6, kind: output, shape index: {1}]
  %7 = xla_tuple %s5, %s6
  %s8 = sld [smem:[#allocation0]]
  $region42: #{lstm_encoder_forward.1} parent=0
    _
  %s10 = ssub.s32 1, %s8
  %s11 = scalar_select 0, %s10, %s8
  $region1: #{lstm_encoder_forward.1} parent=0
    #allocation2 [shape = 'u8[8192]{0}', space=vmem, size = 0x2000, scoped, tag = 'input window, operand 1, single buffered']
    #allocation3 [shape = 's32[1]{0}', space=sflag, size = 0x4, scoped, tag = 'scoped memory for lstm_encoder_forward.1']
    #allocation4 [shape = 's32[1]{0}', space=sflag, size = 0x4, scoped, tag = 'scoped memory for lstm_encoder_forward.1']
    #allocation5 [shape = 'u8[8192]{0}', space=vmem, size = 0x2000, scoped, tag = 'output window, operand 0, single buffered']
    #allocation6 [shape = 'u8[1024]{0}', space=vmem, size = 0x400, scoped, tag = 'output window, operand 1, single buffered']
    #allocation7 [shape = 's32[1]{0}', space=sflag, size = 0x4, scoped, tag = 'scoped memory for lstm_encoder_forward.1']
    %12 = vsyncpa [#allocation3], 0
    %13 = vsyncpa [#allocation4], 0
    %14 = vsyncpa [#allocation7], 0
    // Predicated region
    $region2: #{lstm_encoder_forward.1} parent=1 // pred_check
      _
    $region3: #{lstm_encoder_forward.1} parent=1 // pred_check_branch
      %16 = sbr.rel (0) target = $region5
    $region4: #{lstm_encoder_forward.1} parent=1 // pred_region
      _
    $region5: #{lstm_encoder_forward.1} parent=1 // pred_fallthru
      _
    // Predicated region
    $region6: #{lstm_encoder_forward.1} parent=1 // pred_check
      _
    $region7: #{lstm_encoder_forward.1} parent=1 // pred_check_branch
      %18 = sbr.rel (0) target = $region9
    $region8: #{lstm_encoder_forward.1} parent=1 // pred_region
      %s20 = ssub.s32 256, 256
      %21 = vsyncadd [#allocation3], %s20
      %s22 = sshll.u32 [#allocation2], 4
      %s23 = int_to_ptr.vmem [resolvable:$true] %s22
      %28 = dma.hbm_to_vmem [thread:$0]  %s1, 256, %s23, [#allocation3], 128, 128, 8
    $region9: #{lstm_encoder_forward.1} parent=1 // pred_fallthru
      _
    // Predicated region
    $region10: #{lstm_encoder_forward.1} parent=1 // pred_check
      _
    $region11: #{lstm_encoder_forward.1} parent=1 // pred_check_branch
      %30 = sbr.rel (0) target = $region13
    $region12: #{lstm_encoder_forward.1} parent=1 // pred_region
      _
    $region13: #{lstm_encoder_forward.1} parent=1 // pred_fallthru
      _
    // Predicated region
    $region14: #{lstm_encoder_forward.1} parent=1 // pred_check
      _
    $region15: #{lstm_encoder_forward.1} parent=1 // pred_check_branch
      %32 = sbr.rel (0) target = $region17
    $region16: #{lstm_encoder_forward.1} parent=1 // pred_region
      _
    $region17: #{lstm_encoder_forward.1} parent=1 // pred_fallthru
      _
    // Predicated region
    $region18: #{lstm_encoder_forward.1} parent=1 // pred_check
      _
    $region19: #{lstm_encoder_forward.1} parent=1 // pred_check_branch
      %34 = sbr.rel (0) target = $region21
    $region20: #{lstm_encoder_forward.1} parent=1 // pred_region
      _
    $region21: #{lstm_encoder_forward.1} parent=1 // pred_fallthru
      _
    // Predicated region
    $region22: #{lstm_encoder_forward.1} parent=1 // pred_check
      _
    $region23: #{lstm_encoder_forward.1} parent=1 // pred_check_branch
      %36 = sbr.rel (0) target = $region25
    $region24: #{lstm_encoder_forward.1} parent=1 // pred_region
      %37 = dma.done [#allocation3], 256
    $region25: #{lstm_encoder_forward.1} parent=1 // pred_fallthru
      _
    %v38 = vld [vmem:[%s0] sm:$0xff]
    %v39 = vld [vmem:[%s0 + $0x8] sm:$0xff]
    %v40 = vld [vmem:[#allocation2] sm:$0xff]
    %v41 = vld [vmem:[#allocation2 + $0x8] sm:$0xff]
    %v42 = vld [vmem:[%s3] sm:$0x1]
    %v44 = vlaneseq
    %v45 = vshrl.u32 %v44, 7
    %v46 = vsub.s32 0, %v45
    %v47 = vrot.slane %v42, %v46
    %vm49 = vcmask 130048
    %v51 = vsel %vm49, %v38, 0
    %v54 = vsel %vm49, %v39, 0
    %56 = vmatprep.subr.mxu0 0.0
    %57 = vmatpush1.msra.mxu0 %v40
    %58 = vmatprep.subr.mxu0 0.0
    %59 = vmatpush1.msra.mxu0 %v41
    %60 = vmatprep.subr.mxu0 0.0
    %61 = vmatpush1.msra.mxu0 0.0
    %62 = vmatprep.subr.mxu0 0.0
    %63 = vmatpush1.msra.mxu0 0.0
    %64 = vmatprep.subr.mxu0 0.0
    %65 = vmatpush1.msra.mxu0 0.0
    %66 = vmatprep.subr.mxu0 0.0
    %67 = vmatpush1.msra.mxu0 0.0
    %68 = vmatprep.subr.mxu0 0.0
    %69 = vmatpush1.msra.mxu0 0.0
    %70 = vmatprep.subr.mxu0 0.0
    %71 = vmatpush1.msra.mxu0 0.0
    %72 = vmatprep.subr.mxu0 0.0
    %73 = vmatpush1.msra.mxu0 0.0
    %74 = vmatprep.subr.mxu0 0.0
    %75 = vmatpush1.msra.mxu0 0.0
    %76 = vmatprep.subr.mxu0 0.0
    %77 = vmatpush1.msra.mxu0 0.0
    %78 = vmatprep.subr.mxu0 0.0
    %79 = vmatpush1.msra.mxu0 0.0
    %80 = vmatprep.subr.mxu0 0.0
    %81 = vmatpush1.msra.mxu0 0.0
    %82 = vmatprep.subr.mxu0 0.0
    %83 = vmatpush1.msra.mxu0 0.0
    %84 = vmatprep.subr.mxu0 0.0
    %85 = vmatpush1.msra.mxu0 0.0
    %86 = vmatprep.subr.mxu0 0.0
    %87 = vmatpush1.msra.mxu0 0.0
    %88 = vmatprep.subr.mxu0 0.0
    %89 = vmatpush1.msra.mxu0 0.0
    %90 = vmatprep.subr.mxu0 0.0
    %91 = vmatpush1.msra.mxu0 0.0
    %92 = vmatprep.subr.mxu0 0.0
    %93 = vmatpush1.msra.mxu0 0.0
    %94 = vmatprep.subr.mxu0 0.0
    %95 = vmatpush1.msra.mxu0 0.0
    %96 = vmatprep.subr.mxu0 0.0
    %97 = vmatpush1.msra.mxu0 0.0
    %98 = vmatprep.subr.mxu0 0.0
    %99 = vmatpush1.msra.mxu0 0.0
    %100 = vmatprep.subr.mxu0 0.0
    %101 = vmatpush1.msra.mxu0 0.0
    %102 = vmatprep.subr.mxu0 0.0
    %103 = vmatpush1.msra.mxu0 0.0
    %104 = vmatprep.subr.mxu0 0.0
    %105 = vmatpush1.msra.mxu0 0.0
    %106 = vmatprep.subr.mxu0 0.0
    %107 = vmatpush1.msra.mxu0 0.0
    %108 = vmatprep.subr.mxu0 0.0
    %109 = vmatpush1.msra.mxu0 0.0
    %110 = vmatprep.subr.mxu0 0.0
    %111 = vmatpush1.msra.mxu0 0.0
    %112 = vmatprep.subr.mxu0 0.0
    %113 = vmatpush1.msra.mxu0 0.0
    %114 = vmatprep.subr.mxu0 0.0
    %115 = vmatpush1.msra.mxu0 0.0
    %116 = vmatprep.subr.mxu0 0.0
    %117 = vmatpush1.msra.mxu0 0.0
    %118 = vmatprep.subr.mxu0 0.0
    %119 = vmatpush1.msra.mxu0 0.0
    %120 = vmatprep.mubr.f32.mxu0 0.0
    %121 = vmatmul.mubr.f32.gmra.mrb[0].mxu0 %v51
    %v122 = vpop.f32.mrb[0].mxu0
    %v123 = vadd.f32 %v47, %v122
    %v124 = vpop.f32.mrb[0].mxu0
    %125 = vmatprep.mubr.f32.mxu0 0.0
    %126 = vmatmul.mubr.f32.gmra.mrb[0].mxu0 %v54
    %v127 = vpop.f32.mrb[0].mxu0
    %v128 = vadd.f32 %v47, %v127
    %v129 = vpop.f32.mrb[0].mxu0
    %130 = vdwg.mxu0
    %v131 = vld [vmem:[%s2] sm:$0xff]
    %v132 = vld [vmem:[%s2 + $0x8] sm:$0xff]
    %v133 = vld [vmem:[%s2 + $0x10] sm:$0xff]
    %v134 = vld [vmem:[%s2 + $0x18] sm:$0xff]
    %vm135 = vcmask 261120
    %v137 = vsel %vm135, 0.0, 0
    %139 = vmatprep.subr.mxu0 0.0
    %140 = vmatpush1.msra.mxu0 %v131
    %141 = vmatprep.subr.mxu0 0.0
    %142 = vmatpush1.msra.mxu0 %v132
    %143 = vmatprep.subr.mxu0 0.0
    %144 = vmatpush1.msra.mxu0 %v133
    %145 = vmatprep.subr.mxu0 0.0
    %146 = vmatpush1.msra.mxu0 %v134
    %147 = vmatprep.subr.mxu0 0.0
    %148 = vmatpush1.msra.mxu0 0.0
    %149 = vmatprep.subr.mxu0 0.0
    %150 = vmatpush1.msra.mxu0 0.0
    %151 = vmatprep.subr.mxu0 0.0
    %152 = vmatpush1.msra.mxu0 0.0
    %153 = vmatprep.subr.mxu0 0.0
    %154 = vmatpush1.msra.mxu0 0.0
    %155 = vmatprep.subr.mxu0 0.0
    %156 = vmatpush1.msra.mxu0 0.0
    %157 = vmatprep.subr.mxu0 0.0
    %158 = vmatpush1.msra.mxu0 0.0
    %159 = vmatprep.subr.mxu0 0.0
    %160 = vmatpush1.msra.mxu0 0.0
    %161 = vmatprep.subr.mxu0 0.0
    %162 = vmatpush1.msra.mxu0 0.0
    %163 = vmatprep.subr.mxu0 0.0
    %164 = vmatpush1.msra.mxu0 0.0
    %165 = vmatprep.subr.mxu0 0.0
    %166 = vmatpush1.msra.mxu0 0.0
    %167 = vmatprep.subr.mxu0 0.0
    %168 = vmatpush1.msra.mxu0 0.0
    %169 = vmatprep.subr.mxu0 0.0
    %170 = vmatpush1.msra.mxu0 0.0
    %171 = vmatprep.subr.mxu0 0.0
    %172 = vmatpush1.msra.mxu0 0.0
    %173 = vmatprep.subr.mxu0 0.0
    %174 = vmatpush1.msra.mxu0 0.0
    %175 = vmatprep.subr.mxu0 0.0
    %176 = vmatpush1.msra.mxu0 0.0
    %177 = vmatprep.subr.mxu0 0.0
    %178 = vmatpush1.msra.mxu0 0.0
    %179 = vmatprep.subr.mxu0 0.0
    %180 = vmatpush1.msra.mxu0 0.0
    %181 = vmatprep.subr.mxu0 0.0
    %182 = vmatpush1.msra.mxu0 0.0
    %183 = vmatprep.subr.mxu0 0.0
    %184 = vmatpush1.msra.mxu0 0.0
    %185 = vmatprep.subr.mxu0 0.0
    %186 = vmatpush1.msra.mxu0 0.0
    %187 = vmatprep.subr.mxu0 0.0
    %188 = vmatpush1.msra.mxu0 0.0
    %189 = vmatprep.subr.mxu0 0.0
    %190 = vmatpush1.msra.mxu0 0.0
    %191 = vmatprep.subr.mxu0 0.0
    %192 = vmatpush1.msra.mxu0 0.0
    %193 = vmatprep.subr.mxu0 0.0
    %194 = vmatpush1.msra.mxu0 0.0
    %195 = vmatprep.subr.mxu0 0.0
    %196 = vmatpush1.msra.mxu0 0.0
    %197 = vmatprep.subr.mxu0 0.0
    %198 = vmatpush1.msra.mxu0 0.0
    %199 = vmatprep.subr.mxu0 0.0
    %200 = vmatpush1.msra.mxu0 0.0
    %201 = vmatprep.subr.mxu0 0.0
    %202 = vmatpush1.msra.mxu0 0.0
    %203 = vmatprep.mubr.f32.mxu0 0.0
    %204 = vmatmul.mubr.f32.gmra.mrb[0].mxu0 %v137
    %v205 = vpop.f32.mrb[0].mxu0
    %v206 = vadd.f32 0.0, %v205
    %v207 = vpop.f32.mrb[0].mxu0
    %208 = vdwg.mxu0
    %v210 = vrot.slane %v206, 1
    %v213 = vadd.f32 %v123, %v206
    %v214 = vadd.f32 %v128, %v210
    %v215 = vxor.u32 %v213, 2147483648
    %v216 = vxor.u32 %v214, 2147483648
    %v217 = vmul.f32 %v215, 1.442695
    %v218 = vpow.pop %v217
    %v219 = vmul.f32 %v216, 1.442695
    %v220 = vpow.pop %v219
    %v221 = vadd.f32 %v218, 1.0
    %v222 = vadd.f32 %v220, 1.0
    %v223 = vrcp.pop %v221
    %v224 = vmul.f32 1.0, %v223
    %v225 = vrcp.pop %v222
    %v226 = vmul.f32 1.0, %v225
    %v227 = vtanh.pop %v213
    %v228 = vtanh.pop %v214
    %v229 = vmul.f32 %v224, 0.0
    %v230 = vmul.f32 %v226, 0.0
    %233 = vrot.lane.b32.xlu0 %v227, 64
    %v234 = vpop.permute.xlu0 %233
    %235 = vrot.lane.b32.xlu0 %v228, 64
    %v236 = vpop.permute.xlu0 %235
    %v239 = vmul.f32 %v224, %v234
    %v240 = vmul.f32 %v226, %v236
    %243 = vrot.lane.b32.xlu0 %v239, 32
    %v244 = vpop.permute.xlu0 %243
    %245 = vrot.lane.b32.xlu0 %v240, 32
    %v246 = vpop.permute.xlu0 %245
    %v249 = vadd.f32 %v229, %v244
    %v250 = vadd.f32 %v230, %v246
    %v251 = vtanh.pop %v249
    %v252 = vtanh.pop %v250
    %255 = vrot.lane.b32.xlu0 %v251, 64
    %v256 = vpop.permute.xlu0 %255
    %257 = vrot.lane.b32.xlu0 %v252, 64
    %v258 = vpop.permute.xlu0 %257
    %v261 = vmul.f32 %v224, %v256
    %v262 = vmul.f32 %v226, %v258
    %v263 = vld [vmem:[%s4] sm:$0x3]
    %v266 = vrot.slane %v250, 7
    %vm267 = vcmask 1041409
    %v268 = vsel %vm267, %v266, %v249
    %269 = vrot.lane.b32.xlu0 %v268, 96
    %v270 = vpop.permute.xlu0 %269
    %v272 = vmul.f32 %v263, %v270
    %v273 = vadd.f32 %v272, 0.0
    %v276 = vrot.slane %v262, 7
    %v277 = vsel %vm267, %v276, %v261
    %278 = vrot.lane.b32.xlu0 %v277, 32
    %v279 = vpop.permute.xlu0 %278
    %v281 = vmul.f32 %v263, %v279
    %v282 = vadd.f32 %v281, 0.0
    %v285 = vunpack.c.l.s4 1966171168
    %v286 = vunpack.c.0.s8 %v285
    %v287 = vlaneseq
    %v288 = vshrl.u32 %v287, 7
    %v289 = vsub.s32 %v286, %v288
    %v290 = vrot.slane %v281, %v289
    %v291 = vcombine.high %v290, %v290
    %v293 = vunpack.c.l.s4 1966171168
    %v294 = vunpack.c.0.s8 %v293
    %v295 = vlaneseq
    %v296 = vshrl.u32 %v295, 7
    %v297 = vsub.s32 %v294, %v296
    %v298 = vrot.slane %v290, %v297
    %v300 = vunpack.c.l.s4 1966171168
    %v301 = vunpack.c.0.s8 %v300
    %v302 = vlaneseq
    %v303 = vshrl.u32 %v302, 7
    %v304 = vsub.s32 %v301, %v303
    %v305 = vrot.slane %v291, %v304
    %vm308 = vcmask 253952
    %309 = vst.msk [vmem:[#allocation5] sm:$0x1] %vm308, %v298
    %310 = vst.msk [vmem:[#allocation5 + $0x8] sm:$0x1] %vm308, %v305
    %v312 = vsel %vm135, %v282, 0
    %314 = vmatprep.subr.mxu0 0.0
    %315 = vmatpush1.msra.mxu0 %v131
    %316 = vmatprep.subr.mxu0 0.0
    %317 = vmatpush1.msra.mxu0 %v132
    %318 = vmatprep.subr.mxu0 0.0
    %319 = vmatpush1.msra.mxu0 %v133
    %320 = vmatprep.subr.mxu0 0.0
    %321 = vmatpush1.msra.mxu0 %v134
    %322 = vmatprep.subr.mxu0 0.0
    %323 = vmatpush1.msra.mxu0 0.0
    %324 = vmatprep.subr.mxu0 0.0
    %325 = vmatpush1.msra.mxu0 0.0
    %326 = vmatprep.subr.mxu0 0.0
    %327 = vmatpush1.msra.mxu0 0.0
    %328 = vmatprep.subr.mxu0 0.0
    %329 = vmatpush1.msra.mxu0 0.0
    %330 = vmatprep.subr.mxu0 0.0
    %331 = vmatpush1.msra.mxu0 0.0
    %332 = vmatprep.subr.mxu0 0.0
    %333 = vmatpush1.msra.mxu0 0.0
    %334 = vmatprep.subr.mxu0 0.0
    %335 = vmatpush1.msra.mxu0 0.0
    %336 = vmatprep.subr.mxu0 0.0
    %337 = vmatpush1.msra.mxu0 0.0
    %338 = vmatprep.subr.mxu0 0.0
    %339 = vmatpush1.msra.mxu0 0.0
    %340 = vmatprep.subr.mxu0 0.0
    %341 = vmatpush1.msra.mxu0 0.0
    %342 = vmatprep.subr.mxu0 0.0
    %343 = vmatpush1.msra.mxu0 0.0
    %344 = vmatprep.subr.mxu0 0.0
    %345 = vmatpush1.msra.mxu0 0.0
    %346 = vmatprep.subr.mxu0 0.0
    %347 = vmatpush1.msra.mxu0 0.0
    %348 = vmatprep.subr.mxu0 0.0
    %349 = vmatpush1.msra.mxu0 0.0
    %350 = vmatprep.subr.mxu0 0.0
    %351 = vmatpush1.msra.mxu0 0.0
    %352 = vmatprep.subr.mxu0 0.0
    %353 = vmatpush1.msra.mxu0 0.0
    %354 = vmatprep.subr.mxu0 0.0
    %355 = vmatpush1.msra.mxu0 0.0
    %356 = vmatprep.subr.mxu0 0.0
    %357 = vmatpush1.msra.mxu0 0.0
    %358 = vmatprep.subr.mxu0 0.0
    %359 = vmatpush1.msra.mxu0 0.0
    %360 = vmatprep.subr.mxu0 0.0
    %361 = vmatpush1.msra.mxu0 0.0
    %362 = vmatprep.subr.mxu0 0.0
    %363 = vmatpush1.msra.mxu0 0.0
    %364 = vmatprep.subr.mxu0 0.0
    %365 = vmatpush1.msra.mxu0 0.0
    %366 = vmatprep.subr.mxu0 0.0
    %367 = vmatpush1.msra.mxu0 0.0
    %368 = vmatprep.subr.mxu0 0.0
    %369 = vmatpush1.msra.mxu0 0.0
    %370 = vmatprep.subr.mxu0 0.0
    %371 = vmatpush1.msra.mxu0 0.0
    %372 = vmatprep.subr.mxu0 0.0
    %373 = vmatpush1.msra.mxu0 0.0
    %374 = vmatprep.subr.mxu0 0.0
    %375 = vmatpush1.msra.mxu0 0.0
    %376 = vmatprep.subr.mxu0 0.0
    %377 = vmatpush1.msra.mxu0 0.0
    %378 = vmatprep.mubr.f32.mxu0 0.0
    %379 = vmatmul.mubr.f32.gmra.mrb[0].mxu0 %v312
    %v380 = vpop.f32.mrb[0].mxu0
    %v381 = vadd.f32 0.0, %v380
    %v382 = vpop.f32.mrb[0].mxu0
    %383 = vdwg.mxu0
    %v385 = vrot.slane %v381, 7
    %v388 = vadd.f32 %v123, %v385
    %v389 = vadd.f32 %v128, %v381
    %v390 = vxor.u32 %v388, 2147483648
    %v391 = vxor.u32 %v389, 2147483648
    %v392 = vmul.f32 %v390, 1.442695
    %v393 = vpow.pop %v392
    %v394 = vmul.f32 %v391, 1.442695
    %v395 = vpow.pop %v394
    %v396 = vadd.f32 %v393, 1.0
    %v397 = vadd.f32 %v395, 1.0
    %v398 = vrcp.pop %v396
    %v399 = vmul.f32 1.0, %v398
    %v400 = vrcp.pop %v397
    %v401 = vmul.f32 1.0, %v400
    %v402 = vtanh.pop %v388
    %v403 = vtanh.pop %v389
    %v405 = vrot.slane %v273, 7
    %406 = vrot.lane.b32.xlu0 %v405, 32
    %v407 = vpop.permute.xlu0 %406
    %408 = vrot.lane.b32.xlu0 %v273, 32
    %v409 = vpop.permute.xlu0 %408
    %v412 = vmul.f32 %v399, %v407
    %v413 = vmul.f32 %v401, %v409
    %416 = vrot.lane.b32.xlu0 %v402, 64
    %v417 = vpop.permute.xlu0 %416
    %418 = vrot.lane.b32.xlu0 %v403, 64
    %v419 = vpop.permute.xlu0 %418
    %v422 = vmul.f32 %v399, %v417
    %v423 = vmul.f32 %v401, %v419
    %426 = vrot.lane.b32.xlu0 %v422, 32
    %v427 = vpop.permute.xlu0 %426
    %428 = vrot.lane.b32.xlu0 %v423, 32
    %v429 = vpop.permute.xlu0 %428
    %v432 = vadd.f32 %v412, %v427
    %v433 = vadd.f32 %v413, %v429
    %v434 = vtanh.pop %v432
    %v435 = vtanh.pop %v433
    %438 = vrot.lane.b32.xlu0 %v434, 64
    %v439 = vpop.permute.xlu0 %438
    %440 = vrot.lane.b32.xlu0 %v435, 64
    %v441 = vpop.permute.xlu0 %440
    %v444 = vmul.f32 %v399, %v439
    %v445 = vmul.f32 %v401, %v441
    %s446 = scalar_lea.vmem %s4, 2
    %v447 = vld [vmem:[%s446] sm:$0x3]
    %v448 = vsub.f32 %v432, %v407
    %v449 = vsub.f32 %v433, %v409
    %v452 = vrot.slane %v448, 1
    %v453 = vsel %vm267, %v449, %v452
    %454 = vrot.lane.b32.xlu0 %v453, 96
    %v455 = vpop.permute.xlu0 %454
    %v457 = vmul.f32 %v447, %v455
    %v458 = vadd.f32 %v273, %v457
    %v459 = vrot.slane %v282, 7
    %460 = vrot.lane.b32.xlu0 %v459, 96
    %v461 = vpop.permute.xlu0 %460
    %462 = vrot.lane.b32.xlu0 %v282, 96
    %v463 = vpop.permute.xlu0 %462
    %v466 = vsub.f32 %v444, %v461
    %v467 = vsub.f32 %v445, %v463
    %v470 = vrot.slane %v466, 1
    %v471 = vsel %vm267, %v467, %v470
    %472 = vrot.lane.b32.xlu0 %v471, 32
    %v473 = vpop.permute.xlu0 %472
    %v475 = vmul.f32 %v447, %v473
    %v476 = vadd.f32 %v282, %v475
    %v479 = vrot.slane %v444, 1
    %v480 = vsel %vm267, %v445, %v479
    %481 = vrot.lane.b32.xlu0 %v480, 32
    %v482 = vpop.permute.xlu0 %481
    %v484 = vmul.f32 %v447, %v482
    %v487 = vunpack.c.l.s4 1966171168
    %v488 = vunpack.c.0.s8 %v487
    %v489 = vlaneseq
    %v490 = vshrl.u32 %v489, 7
    %v491 = vsub.s32 %v488, %v490
    %v492 = vrot.slane %v484, %v491
    %v493 = vcombine.high %v492, %v492
    %v495 = vunpack.c.l.s4 1966171168
    %v496 = vunpack.c.0.s8 %v495
    %v497 = vlaneseq
    %v498 = vshrl.u32 %v497, 7
    %v499 = vsub.s32 %v496, %v498
    %v500 = vrot.slane %v492, %v499
    %v502 = vunpack.c.l.s4 1966171168
    %v503 = vunpack.c.0.s8 %v502
    %v504 = vlaneseq
    %v505 = vshrl.u32 %v504, 7
    %v506 = vsub.s32 %v503, %v505
    %v507 = vrot.slane %v493, %v506
    %510 = vst.msk [vmem:[#allocation5 + $0x1] sm:$0x1] %vm308, %v500
    %511 = vst.msk [vmem:[#allocation5 + $0x9] sm:$0x1] %vm308, %v507
    %v513 = vsel %vm135, %v476, 0
    %515 = vmatprep.subr.mxu0 0.0
    %516 = vmatpush1.msra.mxu0 %v131
    %517 = vmatprep.subr.mxu0 0.0
    %518 = vmatpush1.msra.mxu0 %v132
    %519 = vmatprep.subr.mxu0 0.0
    %520 = vmatpush1.msra.mxu0 %v133
    %521 = vmatprep.subr.mxu0 0.0
    %522 = vmatpush1.msra.mxu0 %v134
    %523 = vmatprep.subr.mxu0 0.0
    %524 = vmatpush1.msra.mxu0 0.0
    %525 = vmatprep.subr.mxu0 0.0
    %526 = vmatpush1.msra.mxu0 0.0
    %527 = vmatprep.subr.mxu0 0.0
    %528 = vmatpush1.msra.mxu0 0.0
    %529 = vmatprep.subr.mxu0 0.0
    %530 = vmatpush1.msra.mxu0 0.0
    %531 = vmatprep.subr.mxu0 0.0
    %532 = vmatpush1.msra.mxu0 0.0
    %533 = vmatprep.subr.mxu0 0.0
    %534 = vmatpush1.msra.mxu0 0.0
    %535 = vmatprep.subr.mxu0 0.0
    %536 = vmatpush1.msra.mxu0 0.0
    %537 = vmatprep.subr.mxu0 0.0
    %538 = vmatpush1.msra.mxu0 0.0
    %539 = vmatprep.subr.mxu0 0.0
    %540 = vmatpush1.msra.mxu0 0.0
    %541 = vmatprep.subr.mxu0 0.0
    %542 = vmatpush1.msra.mxu0 0.0
    %543 = vmatprep.subr.mxu0 0.0
    %544 = vmatpush1.msra.mxu0 0.0
    %545 = vmatprep.subr.mxu0 0.0
    %546 = vmatpush1.msra.mxu0 0.0
    %547 = vmatprep.subr.mxu0 0.0
    %548 = vmatpush1.msra.mxu0 0.0
    %549 = vmatprep.subr.mxu0 0.0
    %550 = vmatpush1.msra.mxu0 0.0
    %551 = vmatprep.subr.mxu0 0.0
    %552 = vmatpush1.msra.mxu0 0.0
    %553 = vmatprep.subr.mxu0 0.0
    %554 = vmatpush1.msra.mxu0 0.0
    %555 = vmatprep.subr.mxu0 0.0
    %556 = vmatpush1.msra.mxu0 0.0
    %557 = vmatprep.subr.mxu0 0.0
    %558 = vmatpush1.msra.mxu0 0.0
    %559 = vmatprep.subr.mxu0 0.0
    %560 = vmatpush1.msra.mxu0 0.0
    %561 = vmatprep.subr.mxu0 0.0
    %562 = vmatpush1.msra.mxu0 0.0
    %563 = vmatprep.subr.mxu0 0.0
    %564 = vmatpush1.msra.mxu0 0.0
    %565 = vmatprep.subr.mxu0 0.0
    %566 = vmatpush1.msra.mxu0 0.0
    %567 = vmatprep.subr.mxu0 0.0
    %568 = vmatpush1.msra.mxu0 0.0
    %569 = vmatprep.subr.mxu0 0.0
    %570 = vmatpush1.msra.mxu0 0.0
    %571 = vmatprep.subr.mxu0 0.0
    %572 = vmatpush1.msra.mxu0 0.0
    %573 = vmatprep.subr.mxu0 0.0
    %574 = vmatpush1.msra.mxu0 0.0
    %575 = vmatprep.subr.mxu0 0.0
    %576 = vmatpush1.msra.mxu0 0.0
    %577 = vmatprep.subr.mxu0 0.0
    %578 = vmatpush1.msra.mxu0 0.0
    %579 = vmatprep.mubr.f32.mxu0 0.0
    %580 = vmatmul.mubr.f32.gmra.mrb[0].mxu0 %v513
    %v581 = vpop.f32.mrb[0].mxu0
    %v582 = vadd.f32 0.0, %v581
    %v583 = vpop.f32.mrb[0].mxu0
    %584 = vdwg.mxu0
    %v586 = vrot.slane %v582, 6
    %v587 = vrot.slane %v582, 7
    %v590 = vadd.f32 %v123, %v586
    %v591 = vadd.f32 %v128, %v587
    %v592 = vxor.u32 %v590, 2147483648
    %v593 = vxor.u32 %v591, 2147483648
    %v594 = vmul.f32 %v592, 1.442695
    %v595 = vpow.pop %v594
    %v596 = vmul.f32 %v593, 1.442695
    %v597 = vpow.pop %v596
    %v598 = vadd.f32 %v595, 1.0
    %v599 = vadd.f32 %v597, 1.0
    %v600 = vrcp.pop %v598
    %v601 = vmul.f32 1.0, %v600
    %v602 = vrcp.pop %v599
    %v603 = vmul.f32 1.0, %v602
    %v604 = vtanh.pop %v590
    %v605 = vtanh.pop %v591
    %v607 = vrot.slane %v458, 6
    %v608 = vrot.slane %v458, 7
    %609 = vrot.lane.b32.xlu0 %v607, 32
    %v610 = vpop.permute.xlu0 %609
    %611 = vrot.lane.b32.xlu0 %v608, 32
    %v612 = vpop.permute.xlu0 %611
    %v615 = vmul.f32 %v601, %v610
    %v616 = vmul.f32 %v603, %v612
    %619 = vrot.lane.b32.xlu0 %v604, 64
    %v620 = vpop.permute.xlu0 %619
    %621 = vrot.lane.b32.xlu0 %v605, 64
    %v622 = vpop.permute.xlu0 %621
    %v625 = vmul.f32 %v601, %v620
    %v626 = vmul.f32 %v603, %v622
    %629 = vrot.lane.b32.xlu0 %v625, 32
    %v630 = vpop.permute.xlu0 %629
    %631 = vrot.lane.b32.xlu0 %v626, 32
    %v632 = vpop.permute.xlu0 %631
    %v635 = vadd.f32 %v615, %v630
    %v636 = vadd.f32 %v616, %v632
    %v637 = vtanh.pop %v635
    %v638 = vtanh.pop %v636
    %641 = vrot.lane.b32.xlu0 %v637, 64
    %v642 = vpop.permute.xlu0 %641
    %643 = vrot.lane.b32.xlu0 %v638, 64
    %v644 = vpop.permute.xlu0 %643
    %v647 = vmul.f32 %v601, %v642
    %v648 = vmul.f32 %v603, %v644
    %s649 = scalar_lea.vmem %s4, 4
    %v650 = vld [vmem:[%s649] sm:$0x3]
    %v651 = vsub.f32 %v635, %v610
    %v652 = vsub.f32 %v636, %v612
    %v655 = vrot.slane %v651, 2
    %v656 = vrot.slane %v652, 1
    %v657 = vsel %vm267, %v656, %v655
    %658 = vrot.lane.b32.xlu0 %v657, 96
    %v659 = vpop.permute.xlu0 %658
    %v661 = vmul.f32 %v650, %v659
    %v662 = vadd.f32 %v458, %v661
    %v663 = vrot.slane %v476, 6
    %v664 = vrot.slane %v476, 7
    %665 = vrot.lane.b32.xlu0 %v663, 96
    %v666 = vpop.permute.xlu0 %665
    %667 = vrot.lane.b32.xlu0 %v664, 96
    %v668 = vpop.permute.xlu0 %667
    %v671 = vsub.f32 %v647, %v666
    %v672 = vsub.f32 %v648, %v668
    %v675 = vrot.slane %v671, 2
    %v676 = vrot.slane %v672, 1
    %v677 = vsel %vm267, %v676, %v675
    %678 = vrot.lane.b32.xlu0 %v677, 32
    %v679 = vpop.permute.xlu0 %678
    %v681 = vmul.f32 %v650, %v679
    %v682 = vadd.f32 %v476, %v681
    %v685 = vrot.slane %v647, 2
    %v686 = vrot.slane %v648, 1
    %v687 = vsel %vm267, %v686, %v685
    %688 = vrot.lane.b32.xlu0 %v687, 32
    %v689 = vpop.permute.xlu0 %688
    %v691 = vmul.f32 %v650, %v689
    %v694 = vunpack.c.l.s4 1966171168
    %v695 = vunpack.c.0.s8 %v694
    %v696 = vlaneseq
    %v697 = vshrl.u32 %v696, 7
    %v698 = vsub.s32 %v695, %v697
    %v699 = vrot.slane %v691, %v698
    %v700 = vcombine.high %v699, %v699
    %v702 = vunpack.c.l.s4 1966171168
    %v703 = vunpack.c.0.s8 %v702
    %v704 = vlaneseq
    %v705 = vshrl.u32 %v704, 7
    %v706 = vsub.s32 %v703, %v705
    %v707 = vrot.slane %v699, %v706
    %v709 = vunpack.c.l.s4 1966171168
    %v710 = vunpack.c.0.s8 %v709
    %v711 = vlaneseq
    %v712 = vshrl.u32 %v711, 7
    %v713 = vsub.s32 %v710, %v712
    %v714 = vrot.slane %v700, %v713
    %717 = vst.msk [vmem:[#allocation5 + $0x2] sm:$0x1] %vm308, %v707
    %718 = vst.msk [vmem:[#allocation5 + $0xa] sm:$0x1] %vm308, %v714
    %v720 = vsel %vm135, %v682, 0
    %722 = vmatprep.subr.mxu0 0.0
    %723 = vmatpush1.msra.mxu0 %v131
    %724 = vmatprep.subr.mxu0 0.0
    %725 = vmatpush1.msra.mxu0 %v132
    %726 = vmatprep.subr.mxu0 0.0
    %727 = vmatpush1.msra.mxu0 %v133
    %728 = vmatprep.subr.mxu0 0.0
    %729 = vmatpush1.msra.mxu0 %v134
    %730 = vmatprep.subr.mxu0 0.0
    %731 = vmatpush1.msra.mxu0 0.0
    %732 = vmatprep.subr.mxu0 0.0
    %733 = vmatpush1.msra.mxu0 0.0
    %734 = vmatprep.subr.mxu0 0.0
    %735 = vmatpush1.msra.mxu0 0.0
    %736 = vmatprep.subr.mxu0 0.0
    %737 = vmatpush1.msra.mxu0 0.0
    %738 = vmatprep.subr.mxu0 0.0
    %739 = vmatpush1.msra.mxu0 0.0
    %740 = vmatprep.subr.mxu0 0.0
    %741 = vmatpush1.msra.mxu0 0.0
    %742 = vmatprep.subr.mxu0 0.0
    %743 = vmatpush1.msra.mxu0 0.0
    %744 = vmatprep.subr.mxu0 0.0
    %745 = vmatpush1.msra.mxu0 0.0
    %746 = vmatprep.subr.mxu0 0.0
    %747 = vmatpush1.msra.mxu0 0.0
    %748 = vmatprep.subr.mxu0 0.0
    %749 = vmatpush1.msra.mxu0 0.0
    %750 = vmatprep.subr.mxu0 0.0
    %751 = vmatpush1.msra.mxu0 0.0
    %752 = vmatprep.subr.mxu0 0.0
    %753 = vmatpush1.msra.mxu0 0.0
    %754 = vmatprep.subr.mxu0 0.0
    %755 = vmatpush1.msra.mxu0 0.0
    %756 = vmatprep.subr.mxu0 0.0
    %757 = vmatpush1.msra.mxu0 0.0
    %758 = vmatprep.subr.mxu0 0.0
    %759 = vmatpush1.msra.mxu0 0.0
    %760 = vmatprep.subr.mxu0 0.0
    %761 = vmatpush1.msra.mxu0 0.0
    %762 = vmatprep.subr.mxu0 0.0
    %763 = vmatpush1.msra.mxu0 0.0
    %764 = vmatprep.subr.mxu0 0.0
    %765 = vmatpush1.msra.mxu0 0.0
    %766 = vmatprep.subr.mxu0 0.0
    %767 = vmatpush1.msra.mxu0 0.0
    %768 = vmatprep.subr.mxu0 0.0
    %769 = vmatpush1.msra.mxu0 0.0
    %770 = vmatprep.subr.mxu0 0.0
    %771 = vmatpush1.msra.mxu0 0.0
    %772 = vmatprep.subr.mxu0 0.0
    %773 = vmatpush1.msra.mxu0 0.0
    %774 = vmatprep.subr.mxu0 0.0
    %775 = vmatpush1.msra.mxu0 0.0
    %776 = vmatprep.subr.mxu0 0.0
    %777 = vmatpush1.msra.mxu0 0.0
    %778 = vmatprep.subr.mxu0 0.0
    %779 = vmatpush1.msra.mxu0 0.0
    %780 = vmatprep.subr.mxu0 0.0
    %781 = vmatpush1.msra.mxu0 0.0
    %782 = vmatprep.subr.mxu0 0.0
    %783 = vmatpush1.msra.mxu0 0.0
    %784 = vmatprep.subr.mxu0 0.0
    %785 = vmatpush1.msra.mxu0 0.0
    %786 = vmatprep.mubr.f32.mxu0 0.0
    %787 = vmatmul.mubr.f32.gmra.mrb[0].mxu0 %v720
    %v788 = vpop.f32.mrb[0].mxu0
    %v789 = vadd.f32 0.0, %v788
    %v790 = vpop.f32.mrb[0].mxu0
    %791 = vdwg.mxu0
    %v793 = vrot.slane %v789, 5
    %v794 = vrot.slane %v789, 6
    %v797 = vadd.f32 %v123, %v793
    %v798 = vadd.f32 %v128, %v794
    %v799 = vxor.u32 %v797, 2147483648
    %v800 = vxor.u32 %v798, 2147483648
    %v801 = vmul.f32 %v799, 1.442695
    %v802 = vpow.pop %v801
    %v803 = vmul.f32 %v800, 1.442695
    %v804 = vpow.pop %v803
    %v805 = vadd.f32 %v802, 1.0
    %v806 = vadd.f32 %v804, 1.0
    %v807 = vrcp.pop %v805
    %v808 = vmul.f32 1.0, %v807
    %v809 = vrcp.pop %v806
    %v810 = vmul.f32 1.0, %v809
    %v811 = vtanh.pop %v797
    %v812 = vtanh.pop %v798
    %v814 = vrot.slane %v662, 5
    %v815 = vrot.slane %v662, 6
    %816 = vrot.lane.b32.xlu0 %v814, 32
    %v817 = vpop.permute.xlu0 %816
    %818 = vrot.lane.b32.xlu0 %v815, 32
    %v819 = vpop.permute.xlu0 %818
    %v822 = vmul.f32 %v808, %v817
    %v823 = vmul.f32 %v810, %v819
    %826 = vrot.lane.b32.xlu0 %v811, 64
    %v827 = vpop.permute.xlu0 %826
    %828 = vrot.lane.b32.xlu0 %v812, 64
    %v829 = vpop.permute.xlu0 %828
    %v832 = vmul.f32 %v808, %v827
    %v833 = vmul.f32 %v810, %v829
    %836 = vrot.lane.b32.xlu0 %v832, 32
    %v837 = vpop.permute.xlu0 %836
    %838 = vrot.lane.b32.xlu0 %v833, 32
    %v839 = vpop.permute.xlu0 %838
    %v842 = vadd.f32 %v822, %v837
    %v843 = vadd.f32 %v823, %v839
    %v844 = vtanh.pop %v842
    %v845 = vtanh.pop %v843
    %848 = vrot.lane.b32.xlu0 %v844, 64
    %v849 = vpop.permute.xlu0 %848
    %850 = vrot.lane.b32.xlu0 %v845, 64
    %v851 = vpop.permute.xlu0 %850
    %v854 = vmul.f32 %v808, %v849
    %v855 = vmul.f32 %v810, %v851
    %s856 = scalar_lea.vmem %s4, 6
    %v857 = vld [vmem:[%s856] sm:$0x3]
    %v858 = vsub.f32 %v842, %v817
    %v859 = vsub.f32 %v843, %v819
    %v862 = vrot.slane %v858, 3
    %v863 = vrot.slane %v859, 2
    %v864 = vsel %vm267, %v863, %v862
    %865 = vrot.lane.b32.xlu0 %v864, 96
    %v866 = vpop.permute.xlu0 %865
    %v868 = vmul.f32 %v857, %v866
    %v869 = vadd.f32 %v662, %v868
    %v870 = vrot.slane %v682, 5
    %v871 = vrot.slane %v682, 6
    %872 = vrot.lane.b32.xlu0 %v870, 96
    %v873 = vpop.permute.xlu0 %872
    %874 = vrot.lane.b32.xlu0 %v871, 96
    %v875 = vpop.permute.xlu0 %874
    %v878 = vsub.f32 %v854, %v873
    %v879 = vsub.f32 %v855, %v875
    %v882 = vrot.slane %v878, 3
    %v883 = vrot.slane %v879, 2
    %v884 = vsel %vm267, %v883, %v882
    %885 = vrot.lane.b32.xlu0 %v884, 32
    %v886 = vpop.permute.xlu0 %885
    %v888 = vmul.f32 %v857, %v886
    %v889 = vadd.f32 %v682, %v888
    %v892 = vrot.slane %v854, 3
    %v893 = vrot.slane %v855, 2
    %v894 = vsel %vm267, %v893, %v892
    %895 = vrot.lane.b32.xlu0 %v894, 32
    %v896 = vpop.permute.xlu0 %895
    %v898 = vmul.f32 %v857, %v896
    %v901 = vunpack.c.l.s4 1966171168
    %v902 = vunpack.c.0.s8 %v901
    %v903 = vlaneseq
    %v904 = vshrl.u32 %v903, 7
    %v905 = vsub.s32 %v902, %v904
    %v906 = vrot.slane %v898, %v905
    %v907 = vcombine.high %v906, %v906
    %v909 = vunpack.c.l.s4 1966171168
    %v910 = vunpack.c.0.s8 %v909
    %v911 = vlaneseq
    %v912 = vshrl.u32 %v911, 7
    %v913 = vsub.s32 %v910, %v912
    %v914 = vrot.slane %v906, %v913
    %v916 = vunpack.c.l.s4 1966171168
    %v917 = vunpack.c.0.s8 %v916
    %v918 = vlaneseq
    %v919 = vshrl.u32 %v918, 7
    %v920 = vsub.s32 %v917, %v919
    %v921 = vrot.slane %v907, %v920
    %924 = vst.msk [vmem:[#allocation5 + $0x3] sm:$0x1] %vm308, %v914
    %925 = vst.msk [vmem:[#allocation5 + $0xb] sm:$0x1] %vm308, %v921
    %v927 = vsel %vm135, %v889, 0
    %929 = vmatprep.subr.mxu0 0.0
    %930 = vmatpush1.msra.mxu0 %v131
    %931 = vmatprep.subr.mxu0 0.0
    %932 = vmatpush1.msra.mxu0 %v132
    %933 = vmatprep.subr.mxu0 0.0
    %934 = vmatpush1.msra.mxu0 %v133
    %935 = vmatprep.subr.mxu0 0.0
    %936 = vmatpush1.msra.mxu0 %v134
    %937 = vmatprep.subr.mxu0 0.0
    %938 = vmatpush1.msra.mxu0 0.0
    %939 = vmatprep.subr.mxu0 0.0
    %940 = vmatpush1.msra.mxu0 0.0
    %941 = vmatprep.subr.mxu0 0.0
    %942 = vmatpush1.msra.mxu0 0.0
    %943 = vmatprep.subr.mxu0 0.0
    %944 = vmatpush1.msra.mxu0 0.0
    %945 = vmatprep.subr.mxu0 0.0
    %946 = vmatpush1.msra.mxu0 0.0
    %947 = vmatprep.subr.mxu0 0.0
    %948 = vmatpush1.msra.mxu0 0.0
    %949 = vmatprep.subr.mxu0 0.0
    %950 = vmatpush1.msra.mxu0 0.0
    %951 = vmatprep.subr.mxu0 0.0
    %952 = vmatpush1.msra.mxu0 0.0
    %953 = vmatprep.subr.mxu0 0.0
    %954 = vmatpush1.msra.mxu0 0.0
    %955 = vmatprep.subr.mxu0 0.0
    %956 = vmatpush1.msra.mxu0 0.0
    %957 = vmatprep.subr.mxu0 0.0
    %958 = vmatpush1.msra.mxu0 0.0
    %959 = vmatprep.subr.mxu0 0.0
    %960 = vmatpush1.msra.mxu0 0.0
    %961 = vmatprep.subr.mxu0 0.0
    %962 = vmatpush1.msra.mxu0 0.0
    %963 = vmatprep.subr.mxu0 0.0
    %964 = vmatpush1.msra.mxu0 0.0
    %965 = vmatprep.subr.mxu0 0.0
    %966 = vmatpush1.msra.mxu0 0.0
    %967 = vmatprep.subr.mxu0 0.0
    %968 = vmatpush1.msra.mxu0 0.0
    %969 = vmatprep.subr.mxu0 0.0
    %970 = vmatpush1.msra.mxu0 0.0
    %971 = vmatprep.subr.mxu0 0.0
    %972 = vmatpush1.msra.mxu0 0.0
    %973 = vmatprep.subr.mxu0 0.0
    %974 = vmatpush1.msra.mxu0 0.0
    %975 = vmatprep.subr.mxu0 0.0
    %976 = vmatpush1.msra.mxu0 0.0
    %977 = vmatprep.subr.mxu0 0.0
    %978 = vmatpush1.msra.mxu0 0.0
    %979 = vmatprep.subr.mxu0 0.0
    %980 = vmatpush1.msra.mxu0 0.0
    %981 = vmatprep.subr.mxu0 0.0
    %982 = vmatpush1.msra.mxu0 0.0
    %983 = vmatprep.subr.mxu0 0.0
    %984 = vmatpush1.msra.mxu0 0.0
    %985 = vmatprep.subr.mxu0 0.0
    %986 = vmatpush1.msra.mxu0 0.0
    %987 = vmatprep.subr.mxu0 0.0
    %988 = vmatpush1.msra.mxu0 0.0
    %989 = vmatprep.subr.mxu0 0.0
    %990 = vmatpush1.msra.mxu0 0.0
    %991 = vmatprep.subr.mxu0 0.0
    %992 = vmatpush1.msra.mxu0 0.0
    %993 = vmatprep.mubr.f32.mxu0 0.0
    %994 = vmatmul.mubr.f32.gmra.mrb[0].mxu0 %v927
    %v995 = vpop.f32.mrb[0].mxu0
    %v996 = vadd.f32 0.0, %v995
    %v997 = vpop.f32.mrb[0].mxu0
    %998 = vdwg.mxu0
    %v1000 = vrot.slane %v996, 4
    %v1001 = vrot.slane %v996, 5
    %v1004 = vadd.f32 %v123, %v1000
    %v1005 = vadd.f32 %v128, %v1001
    %v1006 = vxor.u32 %v1004, 2147483648
    %v1007 = vxor.u32 %v1005, 2147483648
    %v1008 = vmul.f32 %v1006, 1.442695
    %v1009 = vpow.pop %v1008
    %v1010 = vmul.f32 %v1007, 1.442695
    %v1011 = vpow.pop %v1010
    %v1012 = vadd.f32 %v1009, 1.0
    %v1013 = vadd.f32 %v1011, 1.0
    %v1014 = vrcp.pop %v1012
    %v1015 = vmul.f32 1.0, %v1014
    %v1016 = vrcp.pop %v1013
    %v1017 = vmul.f32 1.0, %v1016
    %v1018 = vtanh.pop %v1004
    %v1019 = vtanh.pop %v1005
    %v1021 = vrot.slane %v869, 4
    %v1022 = vrot.slane %v869, 5
    %1023 = vrot.lane.b32.xlu0 %v1021, 32
    %v1024 = vpop.permute.xlu0 %1023
    %1025 = vrot.lane.b32.xlu0 %v1022, 32
    %v1026 = vpop.permute.xlu0 %1025
    %v1029 = vmul.f32 %v1015, %v1024
    %v1030 = vmul.f32 %v1017, %v1026
    %1033 = vrot.lane.b32.xlu0 %v1018, 64
    %v1034 = vpop.permute.xlu0 %1033
    %1035 = vrot.lane.b32.xlu0 %v1019, 64
    %v1036 = vpop.permute.xlu0 %1035
    %v1039 = vmul.f32 %v1015, %v1034
    %v1040 = vmul.f32 %v1017, %v1036
    %1043 = vrot.lane.b32.xlu0 %v1039, 32
    %v1044 = vpop.permute.xlu0 %1043
    %1045 = vrot.lane.b32.xlu0 %v1040, 32
    %v1046 = vpop.permute.xlu0 %1045
    %v1049 = vadd.f32 %v1029, %v1044
    %v1050 = vadd.f32 %v1030, %v1046
    %v1051 = vtanh.pop %v1049
    %v1052 = vtanh.pop %v1050
    %1055 = vrot.lane.b32.xlu0 %v1051, 64
    %v1056 = vpop.permute.xlu0 %1055
    %1057 = vrot.lane.b32.xlu0 %v1052, 64
    %v1058 = vpop.permute.xlu0 %1057
    %v1061 = vmul.f32 %v1015, %v1056
    %v1062 = vmul.f32 %v1017, %v1058
    %s1063 = scalar_lea.vmem %s4, 8
    %v1064 = vld [vmem:[%s1063] sm:$0x3]
    %v1065 = vsub.f32 %v1049, %v1024
    %v1066 = vsub.f32 %v1050, %v1026
    %v1069 = vrot.slane %v1065, 4
    %v1070 = vrot.slane %v1066, 3
    %v1071 = vsel %vm267, %v1070, %v1069
    %1072 = vrot.lane.b32.xlu0 %v1071, 96
    %v1073 = vpop.permute.xlu0 %1072
    %v1075 = vmul.f32 %v1064, %v1073
    %v1076 = vadd.f32 %v869, %v1075
    %v1077 = vrot.slane %v889, 4
    %v1078 = vrot.slane %v889, 5
    %1079 = vrot.lane.b32.xlu0 %v1077, 96
    %v1080 = vpop.permute.xlu0 %1079
    %1081 = vrot.lane.b32.xlu0 %v1078, 96
    %v1082 = vpop.permute.xlu0 %1081
    %v1085 = vsub.f32 %v1061, %v1080
    %v1086 = vsub.f32 %v1062, %v1082
    %v1089 = vrot.slane %v1085, 4
    %v1090 = vrot.slane %v1086, 3
    %v1091 = vsel %vm267, %v1090, %v1089
    %1092 = vrot.lane.b32.xlu0 %v1091, 32
    %v1093 = vpop.permute.xlu0 %1092
    %v1095 = vmul.f32 %v1064, %v1093
    %v1096 = vadd.f32 %v889, %v1095
    %v1099 = vrot.slane %v1061, 4
    %v1100 = vrot.slane %v1062, 3
    %v1101 = vsel %vm267, %v1100, %v1099
    %1102 = vrot.lane.b32.xlu0 %v1101, 32
    %v1103 = vpop.permute.xlu0 %1102
    %v1105 = vmul.f32 %v1064, %v1103
    %v1108 = vunpack.c.l.s4 1966171168
    %v1109 = vunpack.c.0.s8 %v1108
    %v1110 = vlaneseq
    %v1111 = vshrl.u32 %v1110, 7
    %v1112 = vsub.s32 %v1109, %v1111
    %v1113 = vrot.slane %v1105, %v1112
    %v1114 = vcombine.high %v1113, %v1113
    %v1116 = vunpack.c.l.s4 1966171168
    %v1117 = vunpack.c.0.s8 %v1116
    %v1118 = vlaneseq
    %v1119 = vshrl.u32 %v1118, 7
    %v1120 = vsub.s32 %v1117, %v1119
    %v1121 = vrot.slane %v1113, %v1120
    %v1123 = vunpack.c.l.s4 1966171168
    %v1124 = vunpack.c.0.s8 %v1123
    %v1125 = vlaneseq
    %v1126 = vshrl.u32 %v1125, 7
    %v1127 = vsub.s32 %v1124, %v1126
    %v1128 = vrot.slane %v1114, %v1127
    %1131 = vst.msk [vmem:[#allocation5 + $0x4] sm:$0x1] %vm308, %v1121
    %1132 = vst.msk [vmem:[#allocation5 + $0xc] sm:$0x1] %vm308, %v1128
    %v1134 = vsel %vm135, %v1096, 0
    %1136 = vmatprep.subr.mxu0 0.0
    %1137 = vmatpush1.msra.mxu0 %v131
    %1138 = vmatprep.subr.mxu0 0.0
    %1139 = vmatpush1.msra.mxu0 %v132
    %1140 = vmatprep.subr.mxu0 0.0
    %1141 = vmatpush1.msra.mxu0 %v133
    %1142 = vmatprep.subr.mxu0 0.0
    %1143 = vmatpush1.msra.mxu0 %v134
    %1144 = vmatprep.subr.mxu0 0.0
    %1145 = vmatpush1.msra.mxu0 0.0
    %1146 = vmatprep.subr.mxu0 0.0
    %1147 = vmatpush1.msra.mxu0 0.0
    %1148 = vmatprep.subr.mxu0 0.0
    %1149 = vmatpush1.msra.mxu0 0.0
    %1150 = vmatprep.subr.mxu0 0.0
    %1151 = vmatpush1.msra.mxu0 0.0
    %1152 = vmatprep.subr.mxu0 0.0
    %1153 = vmatpush1.msra.mxu0 0.0
    %1154 = vmatprep.subr.mxu0 0.0
    %1155 = vmatpush1.msra.mxu0 0.0
    %1156 = vmatprep.subr.mxu0 0.0
    %1157 = vmatpush1.msra.mxu0 0.0
    %1158 = vmatprep.subr.mxu0 0.0
    %1159 = vmatpush1.msra.mxu0 0.0
    %1160 = vmatprep.subr.mxu0 0.0
    %1161 = vmatpush1.msra.mxu0 0.0
    %1162 = vmatprep.subr.mxu0 0.0
    %1163 = vmatpush1.msra.mxu0 0.0
    %1164 = vmatprep.subr.mxu0 0.0
    %1165 = vmatpush1.msra.mxu0 0.0
    %1166 = vmatprep.subr.mxu0 0.0
    %1167 = vmatpush1.msra.mxu0 0.0
    %1168 = vmatprep.subr.mxu0 0.0
    %1169 = vmatpush1.msra.mxu0 0.0
    %1170 = vmatprep.subr.mxu0 0.0
    %1171 = vmatpush1.msra.mxu0 0.0
    %1172 = vmatprep.subr.mxu0 0.0
    %1173 = vmatpush1.msra.mxu0 0.0
    %1174 = vmatprep.subr.mxu0 0.0
    %1175 = vmatpush1.msra.mxu0 0.0
    %1176 = vmatprep.subr.mxu0 0.0
    %1177 = vmatpush1.msra.mxu0 0.0
    %1178 = vmatprep.subr.mxu0 0.0
    %1179 = vmatpush1.msra.mxu0 0.0
    %1180 = vmatprep.subr.mxu0 0.0
    %1181 = vmatpush1.msra.mxu0 0.0
    %1182 = vmatprep.subr.mxu0 0.0
    %1183 = vmatpush1.msra.mxu0 0.0
    %1184 = vmatprep.subr.mxu0 0.0
    %1185 = vmatpush1.msra.mxu0 0.0
    %1186 = vmatprep.subr.mxu0 0.0
    %1187 = vmatpush1.msra.mxu0 0.0
    %1188 = vmatprep.subr.mxu0 0.0
    %1189 = vmatpush1.msra.mxu0 0.0
    %1190 = vmatprep.subr.mxu0 0.0
    %1191 = vmatpush1.msra.mxu0 0.0
    %1192 = vmatprep.subr.mxu0 0.0
    %1193 = vmatpush1.msra.mxu0 0.0
    %1194 = vmatprep.subr.mxu0 0.0
    %1195 = vmatpush1.msra.mxu0 0.0
    %1196 = vmatprep.subr.mxu0 0.0
    %1197 = vmatpush1.msra.mxu0 0.0
    %1198 = vmatprep.subr.mxu0 0.0
    %1199 = vmatpush1.msra.mxu0 0.0
    %1200 = vmatprep.mubr.f32.mxu0 0.0
    %1201 = vmatmul.mubr.f32.gmra.mrb[0].mxu0 %v1134
    %v1202 = vpop.f32.mrb[0].mxu0
    %v1203 = vadd.f32 0.0, %v1202
    %v1204 = vpop.f32.mrb[0].mxu0
    %1205 = vdwg.mxu0
    %v1207 = vrot.slane %v1203, 3
    %v1208 = vrot.slane %v1203, 4
    %v1211 = vadd.f32 %v123, %v1207
    %v1212 = vadd.f32 %v128, %v1208
    %v1213 = vxor.u32 %v1211, 2147483648
    %v1214 = vxor.u32 %v1212, 2147483648
    %v1215 = vmul.f32 %v1213, 1.442695
    %v1216 = vpow.pop %v1215
    %v1217 = vmul.f32 %v1214, 1.442695
    %v1218 = vpow.pop %v1217
    %v1219 = vadd.f32 %v1216, 1.0
    %v1220 = vadd.f32 %v1218, 1.0
    %v1221 = vrcp.pop %v1219
    %v1222 = vmul.f32 1.0, %v1221
    %v1223 = vrcp.pop %v1220
    %v1224 = vmul.f32 1.0, %v1223
    %v1225 = vtanh.pop %v1211
    %v1226 = vtanh.pop %v1212
    %v1228 = vrot.slane %v1076, 3
    %v1229 = vrot.slane %v1076, 4
    %1230 = vrot.lane.b32.xlu0 %v1228, 32
    %v1231 = vpop.permute.xlu0 %1230
    %1232 = vrot.lane.b32.xlu0 %v1229, 32
    %v1233 = vpop.permute.xlu0 %1232
    %v1236 = vmul.f32 %v1222, %v1231
    %v1237 = vmul.f32 %v1224, %v1233
    %1240 = vrot.lane.b32.xlu0 %v1225, 64
    %v1241 = vpop.permute.xlu0 %1240
    %1242 = vrot.lane.b32.xlu0 %v1226, 64
    %v1243 = vpop.permute.xlu0 %1242
    %v1246 = vmul.f32 %v1222, %v1241
    %v1247 = vmul.f32 %v1224, %v1243
    %1250 = vrot.lane.b32.xlu0 %v1246, 32
    %v1251 = vpop.permute.xlu0 %1250
    %1252 = vrot.lane.b32.xlu0 %v1247, 32
    %v1253 = vpop.permute.xlu0 %1252
    %v1256 = vadd.f32 %v1236, %v1251
    %v1257 = vadd.f32 %v1237, %v1253
    %v1258 = vtanh.pop %v1256
    %v1259 = vtanh.pop %v1257
    %1262 = vrot.lane.b32.xlu0 %v1258, 64
    %v1263 = vpop.permute.xlu0 %1262
    %1264 = vrot.lane.b32.xlu0 %v1259, 64
    %v1265 = vpop.permute.xlu0 %1264
    %v1268 = vmul.f32 %v1222, %v1263
    %v1269 = vmul.f32 %v1224, %v1265
    %s1270 = scalar_lea.vmem %s4, 10
    %v1271 = vld [vmem:[%s1270] sm:$0x3]
    %v1272 = vsub.f32 %v1256, %v1231
    %v1273 = vsub.f32 %v1257, %v1233
    %v1276 = vrot.slane %v1272, 5
    %v1277 = vrot.slane %v1273, 4
    %v1278 = vsel %vm267, %v1277, %v1276
    %1279 = vrot.lane.b32.xlu0 %v1278, 96
    %v1280 = vpop.permute.xlu0 %1279
    %v1282 = vmul.f32 %v1271, %v1280
    %v1283 = vadd.f32 %v1076, %v1282
    %v1284 = vrot.slane %v1096, 3
    %v1285 = vrot.slane %v1096, 4
    %1286 = vrot.lane.b32.xlu0 %v1284, 96
    %v1287 = vpop.permute.xlu0 %1286
    %1288 = vrot.lane.b32.xlu0 %v1285, 96
    %v1289 = vpop.permute.xlu0 %1288
    %v1292 = vsub.f32 %v1268, %v1287
    %v1293 = vsub.f32 %v1269, %v1289
    %v1296 = vrot.slane %v1292, 5
    %v1297 = vrot.slane %v1293, 4
    %v1298 = vsel %vm267, %v1297, %v1296
    %1299 = vrot.lane.b32.xlu0 %v1298, 32
    %v1300 = vpop.permute.xlu0 %1299
    %v1302 = vmul.f32 %v1271, %v1300
    %v1303 = vadd.f32 %v1096, %v1302
    %v1306 = vrot.slane %v1268, 5
    %v1307 = vrot.slane %v1269, 4
    %v1308 = vsel %vm267, %v1307, %v1306
    %1309 = vrot.lane.b32.xlu0 %v1308, 32
    %v1310 = vpop.permute.xlu0 %1309
    %v1312 = vmul.f32 %v1271, %v1310
    %v1315 = vunpack.c.l.s4 1966171168
    %v1316 = vunpack.c.0.s8 %v1315
    %v1317 = vlaneseq
    %v1318 = vshrl.u32 %v1317, 7
    %v1319 = vsub.s32 %v1316, %v1318
    %v1320 = vrot.slane %v1312, %v1319
    %v1321 = vcombine.high %v1320, %v1320
    %v1323 = vunpack.c.l.s4 1966171168
    %v1324 = vunpack.c.0.s8 %v1323
    %v1325 = vlaneseq
    %v1326 = vshrl.u32 %v1325, 7
    %v1327 = vsub.s32 %v1324, %v1326
    %v1328 = vrot.slane %v1320, %v1327
    %v1330 = vunpack.c.l.s4 1966171168
    %v1331 = vunpack.c.0.s8 %v1330
    %v1332 = vlaneseq
    %v1333 = vshrl.u32 %v1332, 7
    %v1334 = vsub.s32 %v1331, %v1333
    %v1335 = vrot.slane %v1321, %v1334
    %1338 = vst.msk [vmem:[#allocation5 + $0x5] sm:$0x1] %vm308, %v1328
    %1339 = vst.msk [vmem:[#allocation5 + $0xd] sm:$0x1] %vm308, %v1335
    %v1341 = vsel %vm135, %v1303, 0
    %1343 = vmatprep.subr.mxu0 0.0
    %1344 = vmatpush1.msra.mxu0 %v131
    %1345 = vmatprep.subr.mxu0 0.0
    %1346 = vmatpush1.msra.mxu0 %v132
    %1347 = vmatprep.subr.mxu0 0.0
    %1348 = vmatpush1.msra.mxu0 %v133
    %1349 = vmatprep.subr.mxu0 0.0
    %1350 = vmatpush1.msra.mxu0 %v134
    %1351 = vmatprep.subr.mxu0 0.0
    %1352 = vmatpush1.msra.mxu0 0.0
    %1353 = vmatprep.subr.mxu0 0.0
    %1354 = vmatpush1.msra.mxu0 0.0
    %1355 = vmatprep.subr.mxu0 0.0
    %1356 = vmatpush1.msra.mxu0 0.0
    %1357 = vmatprep.subr.mxu0 0.0
    %1358 = vmatpush1.msra.mxu0 0.0
    %1359 = vmatprep.subr.mxu0 0.0
    %1360 = vmatpush1.msra.mxu0 0.0
    %1361 = vmatprep.subr.mxu0 0.0
    %1362 = vmatpush1.msra.mxu0 0.0
    %1363 = vmatprep.subr.mxu0 0.0
    %1364 = vmatpush1.msra.mxu0 0.0
    %1365 = vmatprep.subr.mxu0 0.0
    %1366 = vmatpush1.msra.mxu0 0.0
    %1367 = vmatprep.subr.mxu0 0.0
    %1368 = vmatpush1.msra.mxu0 0.0
    %1369 = vmatprep.subr.mxu0 0.0
    %1370 = vmatpush1.msra.mxu0 0.0
    %1371 = vmatprep.subr.mxu0 0.0
    %1372 = vmatpush1.msra.mxu0 0.0
    %1373 = vmatprep.subr.mxu0 0.0
    %1374 = vmatpush1.msra.mxu0 0.0
    %1375 = vmatprep.subr.mxu0 0.0
    %1376 = vmatpush1.msra.mxu0 0.0
    %1377 = vmatprep.subr.mxu0 0.0
    %1378 = vmatpush1.msra.mxu0 0.0
    %1379 = vmatprep.subr.mxu0 0.0
    %1380 = vmatpush1.msra.mxu0 0.0
    %1381 = vmatprep.subr.mxu0 0.0
    %1382 = vmatpush1.msra.mxu0 0.0
    %1383 = vmatprep.subr.mxu0 0.0
    %1384 = vmatpush1.msra.mxu0 0.0
    %1385 = vmatprep.subr.mxu0 0.0
    %1386 = vmatpush1.msra.mxu0 0.0
    %1387 = vmatprep.subr.mxu0 0.0
    %1388 = vmatpush1.msra.mxu0 0.0
    %1389 = vmatprep.subr.mxu0 0.0
    %1390 = vmatpush1.msra.mxu0 0.0
    %1391 = vmatprep.subr.mxu0 0.0
    %1392 = vmatpush1.msra.mxu0 0.0
    %1393 = vmatprep.subr.mxu0 0.0
    %1394 = vmatpush1.msra.mxu0 0.0
    %1395 = vmatprep.subr.mxu0 0.0
    %1396 = vmatpush1.msra.mxu0 0.0
    %1397 = vmatprep.subr.mxu0 0.0
    %1398 = vmatpush1.msra.mxu0 0.0
    %1399 = vmatprep.subr.mxu0 0.0
    %1400 = vmatpush1.msra.mxu0 0.0
    %1401 = vmatprep.subr.mxu0 0.0
    %1402 = vmatpush1.msra.mxu0 0.0
    %1403 = vmatprep.subr.mxu0 0.0
    %1404 = vmatpush1.msra.mxu0 0.0
    %1405 = vmatprep.subr.mxu0 0.0
    %1406 = vmatpush1.msra.mxu0 0.0
    %1407 = vmatprep.mubr.f32.mxu0 0.0
    %1408 = vmatmul.mubr.f32.gmra.mrb[0].mxu0 %v1341
    %v1409 = vpop.f32.mrb[0].mxu0
    %v1410 = vadd.f32 0.0, %v1409
    %v1411 = vpop.f32.mrb[0].mxu0
    %1412 = vdwg.mxu0
    %v1414 = vrot.slane %v1410, 2
    %v1415 = vrot.slane %v1410, 3
    %v1418 = vadd.f32 %v123, %v1414
    %v1419 = vadd.f32 %v128, %v1415
    %v1420 = vxor.u32 %v1418, 2147483648
    %v1421 = vxor.u32 %v1419, 2147483648
    %v1422 = vmul.f32 %v1420, 1.442695
    %v1423 = vpow.pop %v1422
    %v1424 = vmul.f32 %v1421, 1.442695
    %v1425 = vpow.pop %v1424
    %v1426 = vadd.f32 %v1423, 1.0
    %v1427 = vadd.f32 %v1425, 1.0
    %v1428 = vrcp.pop %v1426
    %v1429 = vmul.f32 1.0, %v1428
    %v1430 = vrcp.pop %v1427
    %v1431 = vmul.f32 1.0, %v1430
    %v1432 = vtanh.pop %v1418
    %v1433 = vtanh.pop %v1419
    %v1435 = vrot.slane %v1283, 2
    %v1436 = vrot.slane %v1283, 3
    %1437 = vrot.lane.b32.xlu0 %v1435, 32
    %v1438 = vpop.permute.xlu0 %1437
    %1439 = vrot.lane.b32.xlu0 %v1436, 32
    %v1440 = vpop.permute.xlu0 %1439
    %v1443 = vmul.f32 %v1429, %v1438
    %v1444 = vmul.f32 %v1431, %v1440
    %1447 = vrot.lane.b32.xlu0 %v1432, 64
    %v1448 = vpop.permute.xlu0 %1447
    %1449 = vrot.lane.b32.xlu0 %v1433, 64
    %v1450 = vpop.permute.xlu0 %1449
    %v1453 = vmul.f32 %v1429, %v1448
    %v1454 = vmul.f32 %v1431, %v1450
    %1457 = vrot.lane.b32.xlu0 %v1453, 32
    %v1458 = vpop.permute.xlu0 %1457
    %1459 = vrot.lane.b32.xlu0 %v1454, 32
    %v1460 = vpop.permute.xlu0 %1459
    %v1463 = vadd.f32 %v1443, %v1458
    %v1464 = vadd.f32 %v1444, %v1460
    %v1465 = vtanh.pop %v1463
    %v1466 = vtanh.pop %v1464
    %1469 = vrot.lane.b32.xlu0 %v1465, 64
    %v1470 = vpop.permute.xlu0 %1469
    %1471 = vrot.lane.b32.xlu0 %v1466, 64
    %v1472 = vpop.permute.xlu0 %1471
    %v1475 = vmul.f32 %v1429, %v1470
    %v1476 = vmul.f32 %v1431, %v1472
    %s1477 = scalar_lea.vmem %s4, 12
    %v1478 = vld [vmem:[%s1477] sm:$0x3]
    %v1479 = vsub.f32 %v1463, %v1438
    %v1480 = vsub.f32 %v1464, %v1440
    %v1483 = vrot.slane %v1479, 6
    %v1484 = vrot.slane %v1480, 5
    %v1485 = vsel %vm267, %v1484, %v1483
    %1486 = vrot.lane.b32.xlu0 %v1485, 96
    %v1487 = vpop.permute.xlu0 %1486
    %v1489 = vmul.f32 %v1478, %v1487
    %v1490 = vadd.f32 %v1283, %v1489
    %v1491 = vrot.slane %v1303, 2
    %v1492 = vrot.slane %v1303, 3
    %1493 = vrot.lane.b32.xlu0 %v1491, 96
    %v1494 = vpop.permute.xlu0 %1493
    %1495 = vrot.lane.b32.xlu0 %v1492, 96
    %v1496 = vpop.permute.xlu0 %1495
    %v1499 = vsub.f32 %v1475, %v1494
    %v1500 = vsub.f32 %v1476, %v1496
    %v1503 = vrot.slane %v1499, 6
    %v1504 = vrot.slane %v1500, 5
    %v1505 = vsel %vm267, %v1504, %v1503
    %1506 = vrot.lane.b32.xlu0 %v1505, 32
    %v1507 = vpop.permute.xlu0 %1506
    %v1509 = vmul.f32 %v1478, %v1507
    %v1510 = vadd.f32 %v1303, %v1509
    %v1513 = vrot.slane %v1475, 6
    %v1514 = vrot.slane %v1476, 5
    %v1515 = vsel %vm267, %v1514, %v1513
    %1516 = vrot.lane.b32.xlu0 %v1515, 32
    %v1517 = vpop.permute.xlu0 %1516
    %v1519 = vmul.f32 %v1478, %v1517
    %v1522 = vunpack.c.l.s4 1966171168
    %v1523 = vunpack.c.0.s8 %v1522
    %v1524 = vlaneseq
    %v1525 = vshrl.u32 %v1524, 7
    %v1526 = vsub.s32 %v1523, %v1525
    %v1527 = vrot.slane %v1519, %v1526
    %v1528 = vcombine.high %v1527, %v1527
    %v1530 = vunpack.c.l.s4 1966171168
    %v1531 = vunpack.c.0.s8 %v1530
    %v1532 = vlaneseq
    %v1533 = vshrl.u32 %v1532, 7
    %v1534 = vsub.s32 %v1531, %v1533
    %v1535 = vrot.slane %v1527, %v1534
    %v1537 = vunpack.c.l.s4 1966171168
    %v1538 = vunpack.c.0.s8 %v1537
    %v1539 = vlaneseq
    %v1540 = vshrl.u32 %v1539, 7
    %v1541 = vsub.s32 %v1538, %v1540
    %v1542 = vrot.slane %v1528, %v1541
    %1545 = vst.msk [vmem:[#allocation5 + $0x6] sm:$0x1] %vm308, %v1535
    %1546 = vst.msk [vmem:[#allocation5 + $0xe] sm:$0x1] %vm308, %v1542
    %v1548 = vsel %vm135, %v1510, 0
    %1550 = vmatprep.subr.mxu0 0.0
    %1551 = vmatpush1.msra.mxu0 %v131
    %1552 = vmatprep.subr.mxu0 0.0
    %1553 = vmatpush1.msra.mxu0 %v132
    %1554 = vmatprep.subr.mxu0 0.0
    %1555 = vmatpush1.msra.mxu0 %v133
    %1556 = vmatprep.subr.mxu0 0.0
    %1557 = vmatpush1.msra.mxu0 %v134
    %1558 = vmatprep.subr.mxu0 0.0
    %1559 = vmatpush1.msra.mxu0 0.0
    %1560 = vmatprep.subr.mxu0 0.0
    %1561 = vmatpush1.msra.mxu0 0.0
    %1562 = vmatprep.subr.mxu0 0.0
    %1563 = vmatpush1.msra.mxu0 0.0
    %1564 = vmatprep.subr.mxu0 0.0
    %1565 = vmatpush1.msra.mxu0 0.0
    %1566 = vmatprep.subr.mxu0 0.0
    %1567 = vmatpush1.msra.mxu0 0.0
    %1568 = vmatprep.subr.mxu0 0.0
    %1569 = vmatpush1.msra.mxu0 0.0
    %1570 = vmatprep.subr.mxu0 0.0
    %1571 = vmatpush1.msra.mxu0 0.0
    %1572 = vmatprep.subr.mxu0 0.0
    %1573 = vmatpush1.msra.mxu0 0.0
    %1574 = vmatprep.subr.mxu0 0.0
    %1575 = vmatpush1.msra.mxu0 0.0
    %1576 = vmatprep.subr.mxu0 0.0
    %1577 = vmatpush1.msra.mxu0 0.0
    %1578 = vmatprep.subr.mxu0 0.0
    %1579 = vmatpush1.msra.mxu0 0.0
    %1580 = vmatprep.subr.mxu0 0.0
    %1581 = vmatpush1.msra.mxu0 0.0
    %1582 = vmatprep.subr.mxu0 0.0
    %1583 = vmatpush1.msra.mxu0 0.0
    %1584 = vmatprep.subr.mxu0 0.0
    %1585 = vmatpush1.msra.mxu0 0.0
    %1586 = vmatprep.subr.mxu0 0.0
    %1587 = vmatpush1.msra.mxu0 0.0
    %1588 = vmatprep.subr.mxu0 0.0
    %1589 = vmatpush1.msra.mxu0 0.0
    %1590 = vmatprep.subr.mxu0 0.0
    %1591 = vmatpush1.msra.mxu0 0.0
    %1592 = vmatprep.subr.mxu0 0.0
    %1593 = vmatpush1.msra.mxu0 0.0
    %1594 = vmatprep.subr.mxu0 0.0
    %1595 = vmatpush1.msra.mxu0 0.0
    %1596 = vmatprep.subr.mxu0 0.0
    %1597 = vmatpush1.msra.mxu0 0.0
    %1598 = vmatprep.subr.mxu0 0.0
    %1599 = vmatpush1.msra.mxu0 0.0
    %1600 = vmatprep.subr.mxu0 0.0
    %1601 = vmatpush1.msra.mxu0 0.0
    %1602 = vmatprep.subr.mxu0 0.0
    %1603 = vmatpush1.msra.mxu0 0.0
    %1604 = vmatprep.subr.mxu0 0.0
    %1605 = vmatpush1.msra.mxu0 0.0
    %1606 = vmatprep.subr.mxu0 0.0
    %1607 = vmatpush1.msra.mxu0 0.0
    %1608 = vmatprep.subr.mxu0 0.0
    %1609 = vmatpush1.msra.mxu0 0.0
    %1610 = vmatprep.subr.mxu0 0.0
    %1611 = vmatpush1.msra.mxu0 0.0
    %1612 = vmatprep.subr.mxu0 0.0
    %1613 = vmatpush1.msra.mxu0 0.0
    %1614 = vmatprep.mubr.f32.mxu0 0.0
    %1615 = vmatmul.mubr.f32.gmra.mrb[0].mxu0 %v1548
    %v1616 = vpop.f32.mrb[0].mxu0
    %v1617 = vadd.f32 0.0, %v1616
    %v1618 = vpop.f32.mrb[0].mxu0
    %1619 = vdwg.mxu0
    %v1621 = vrot.slane %v1617, 1
    %v1622 = vrot.slane %v1617, 2
    %v1625 = vadd.f32 %v123, %v1621
    %v1626 = vadd.f32 %v128, %v1622
    %v1627 = vxor.u32 %v1625, 2147483648
    %v1628 = vxor.u32 %v1626, 2147483648
    %v1629 = vmul.f32 %v1627, 1.442695
    %v1630 = vpow.pop %v1629
    %v1631 = vmul.f32 %v1628, 1.442695
    %v1632 = vpow.pop %v1631
    %v1633 = vadd.f32 %v1630, 1.0
    %v1634 = vadd.f32 %v1632, 1.0
    %v1635 = vrcp.pop %v1633
    %v1636 = vmul.f32 1.0, %v1635
    %v1637 = vrcp.pop %v1634
    %v1638 = vmul.f32 1.0, %v1637
    %v1639 = vtanh.pop %v1625
    %v1640 = vtanh.pop %v1626
    %v1642 = vrot.slane %v1490, 1
    %v1643 = vrot.slane %v1490, 2
    %1644 = vrot.lane.b32.xlu0 %v1642, 32
    %v1645 = vpop.permute.xlu0 %1644
    %1646 = vrot.lane.b32.xlu0 %v1643, 32
    %v1647 = vpop.permute.xlu0 %1646
    %v1650 = vmul.f32 %v1636, %v1645
    %v1651 = vmul.f32 %v1638, %v1647
    %1654 = vrot.lane.b32.xlu0 %v1639, 64
    %v1655 = vpop.permute.xlu0 %1654
    %1656 = vrot.lane.b32.xlu0 %v1640, 64
    %v1657 = vpop.permute.xlu0 %1656
    %v1660 = vmul.f32 %v1636, %v1655
    %v1661 = vmul.f32 %v1638, %v1657
    %1664 = vrot.lane.b32.xlu0 %v1660, 32
    %v1665 = vpop.permute.xlu0 %1664
    %1666 = vrot.lane.b32.xlu0 %v1661, 32
    %v1667 = vpop.permute.xlu0 %1666
    %v1670 = vadd.f32 %v1650, %v1665
    %v1671 = vadd.f32 %v1651, %v1667
    %v1672 = vtanh.pop %v1670
    %v1673 = vtanh.pop %v1671
    %1676 = vrot.lane.b32.xlu0 %v1672, 64
    %v1677 = vpop.permute.xlu0 %1676
    %1678 = vrot.lane.b32.xlu0 %v1673, 64
    %v1679 = vpop.permute.xlu0 %1678
    %v1682 = vmul.f32 %v1636, %v1677
    %v1683 = vmul.f32 %v1638, %v1679
    %s1684 = scalar_lea.vmem %s4, 14
    %v1685 = vld [vmem:[%s1684] sm:$0x3]
    %v1686 = vrot.slane %v1510, 1
    %v1687 = vrot.slane %v1510, 2
    %1688 = vrot.lane.b32.xlu0 %v1686, 96
    %v1689 = vpop.permute.xlu0 %1688
    %1690 = vrot.lane.b32.xlu0 %v1687, 96
    %v1691 = vpop.permute.xlu0 %1690
    %v1694 = vsub.f32 %v1682, %v1689
    %v1695 = vsub.f32 %v1683, %v1691
    %v1698 = vrot.slane %v1694, 7
    %v1699 = vrot.slane %v1695, 6
    %v1700 = vsel %vm267, %v1699, %v1698
    %1701 = vrot.lane.b32.xlu0 %v1700, 32
    %v1702 = vpop.permute.xlu0 %1701
    %v1704 = vmul.f32 %v1685, %v1702
    %v1705 = vadd.f32 %v1510, %v1704
    %v1708 = vrot.slane %v1682, 7
    %v1709 = vrot.slane %v1683, 6
    %v1710 = vsel %vm267, %v1709, %v1708
    %1711 = vrot.lane.b32.xlu0 %v1710, 32
    %v1712 = vpop.permute.xlu0 %1711
    %v1714 = vmul.f32 %v1685, %v1712
    %v1717 = vunpack.c.l.s4 1966171168
    %v1718 = vunpack.c.0.s8 %v1717
    %v1719 = vlaneseq
    %v1720 = vshrl.u32 %v1719, 7
    %v1721 = vsub.s32 %v1718, %v1720
    %v1722 = vrot.slane %v1714, %v1721
    %v1723 = vcombine.high %v1722, %v1722
    %v1725 = vunpack.c.l.s4 1966171168
    %v1726 = vunpack.c.0.s8 %v1725
    %v1727 = vlaneseq
    %v1728 = vshrl.u32 %v1727, 7
    %v1729 = vsub.s32 %v1726, %v1728
    %v1730 = vrot.slane %v1722, %v1729
    %v1732 = vunpack.c.l.s4 1966171168
    %v1733 = vunpack.c.0.s8 %v1732
    %v1734 = vlaneseq
    %v1735 = vshrl.u32 %v1734, 7
    %v1736 = vsub.s32 %v1733, %v1735
    %v1737 = vrot.slane %v1723, %v1736
    %1740 = vst.msk [vmem:[#allocation5 + $0x7] sm:$0x1] %vm308, %v1730
    %1741 = vst.msk [vmem:[#allocation5 + $0xf] sm:$0x1] %vm308, %v1737
    %vm1742 = vcmask 254976
    %1743 = vst.msk [vmem:[#allocation6] sm:$0x3] %vm1742, %v1705
    // Predicated region
    $region26: #{lstm_encoder_forward.1} parent=1 // pred_check
      _
    $region27: #{lstm_encoder_forward.1} parent=1 // pred_check_branch
      %1745 = sbr.rel (0) target = $region29
    $region28: #{lstm_encoder_forward.1} parent=1 // pred_region
      %s1747 = ssub.s32 256, 256
      %1748 = vsyncadd [#allocation4], %s1747
      %s1749 = sshll.u32 [#allocation5], 4
      %s1750 = int_to_ptr.vmem [resolvable:$true] %s1749
      %1755 = dma.vmem_to_hbm [thread:$0]  %s1750, 256, %s5, [#allocation4], 128, 128, 8
    $region29: #{lstm_encoder_forward.1} parent=1 // pred_fallthru
      _
    // Predicated region
    $region30: #{lstm_encoder_forward.1} parent=1 // pred_check
      _
    $region31: #{lstm_encoder_forward.1} parent=1 // pred_check_branch
      %1757 = sbr.rel (0) target = $region33
    $region32: #{lstm_encoder_forward.1} parent=1 // pred_region
      %s1759 = ssub.s32 32, 32
      %1760 = vsyncadd [#allocation7], %s1759
      %s1762 = sshll.u32 [#allocation6], 4
      %s1763 = int_to_ptr.vmem [resolvable:$true] %s1762
      %1765 = dma.vmem_to_hbm [thread:$0]  %s1763, 32, %s6, [#allocation7]
    $region33: #{lstm_encoder_forward.1} parent=1 // pred_fallthru
      _
    // Predicated region
    $region34: #{lstm_encoder_forward.1} parent=1 // pred_check
      _
    $region35: #{lstm_encoder_forward.1} parent=1 // pred_check_branch
      %1767 = sbr.rel (0) target = $region37
    $region36: #{lstm_encoder_forward.1} parent=1 // pred_region
      %1768 = dma.done [#allocation4], 256
    $region37: #{lstm_encoder_forward.1} parent=1 // pred_fallthru
      _
    // Predicated region
    $region38: #{lstm_encoder_forward.1} parent=1 // pred_check
      _
    $region39: #{lstm_encoder_forward.1} parent=1 // pred_check_branch
      %1770 = sbr.rel (0) target = $region41
    $region40: #{lstm_encoder_forward.1} parent=1 // pred_region
      %1771 = dma.done [#allocation7], 32
    $region41: #{lstm_encoder_forward.1} parent=1 // pred_fallthru
      _
    %1772 = vsyncpa [#allocation3], 1
    %1773 = vsyncpa [#allocation4], 1
    %1774 = vsyncpa [#allocation7], 1

</llo_original>
